<compile_context>
chip_gen: v7x
topology: tpu7x:2x2x1
jax: 0.10.0
libtpu: 0.0.40
codegen_flags: <defaults>
</compile_context>

<pallas_src>
import jax
import jax.numpy as jnp
from jax import lax
from jax.experimental import pallas as pl
from jax.experimental.pallas import tpu as pltpu


_MXU_DN = (((1,), (0,)), ((), ()))  # contract lhs dim 1 with rhs dim 0, no batch dims


# ----------------------------------------------------------------------------
# use_conv=True path: 3x3 conv, stride 2, padding 1  ->  9 accumulated matmuls
# ----------------------------------------------------------------------------

def _conv_kernel(w_ref, b_ref, *rest):
    # w_ref: (9, Cout, Cin)   b_ref: (Cout, 1)
    # rest[:9]: 9 tap refs, each (Cin, TN)        rest[9]: output ref (Cout, TN)
    p_refs = rest[:9]
    o_ref = rest[9]
    acc = lax.dot_general(w_ref[0], p_refs[0][...], _MXU_DN,
                          preferred_element_type=jnp.float32)
    for k in range(1, 9):
        acc = acc + lax.dot_general(w_ref[k], p_refs[k][...], _MXU_DN,
                                    preferred_element_type=jnp.float32)
    acc = acc + b_ref[...].astype(jnp.float32)
    o_ref[...] = acc.astype(o_ref.dtype)


def downsample_conv2d(x: jax.Array, weight: jax.Array, bias: jax.Array, *,
                      operand_dtype=None, tile_n: int | None = None,
                      vmem_limit_bytes: int = 48 * 1024 * 1024) -> jax.Array:
    """Conv2d(C, Cout, 3, stride=2, padding=1) forward on the MXU."""
    B, C, H, W = x.shape
    Cout, Cin, kh, kw = weight.shape
    assert Cin == C and (kh, kw) == (3, 3)
    op_dtype = jnp.dtype(operand_dtype) if operand_dtype is not None else jnp.dtype(x.dtype)

    Hout = (H - 1) // 2 + 1
    Wout = (W - 1) // 2 + 1
    N = Hout * Wout
    K = 9 * C

    # --- 9 tap phase views (layout plumbing only; fused into input DMAs) -----
    xp = jnp.pad(x, ((0, 0), (0, 0), (1, 1), (1, 1)))            # (B, C, H+2, W+2)
    taps = []
    for ky in range(3):
        for kx in range(3):
            t = lax.slice(xp, (0, 0, ky, kx),
                          (B, C, ky + 2 * Hout - 1, kx + 2 * Wout - 1),
                          (1, 1, 2, 2))                           # (B, C, Hout, Wout)
            taps.append(t.reshape(B, C, N).astype(op_dtype))

    # weight slab (9, Cout, Cin), tap-major so w3[k] pairs with taps[k]
    w3 = jnp.transpose(weight, (2, 3, 0, 1)).reshape(9, Cout, C).astype(op_dtype)
    b2 = bias.reshape(Cout, 1).astype(jnp.float32)

    # Lane-dense N tile (multiple of 128) under a ~12 MiB streaming budget.
    if tile_n is None:
        budget = 12 * 1024 * 1024
        per_col = 2 * (9 * C * op_dtype.itemsize + Cout * x.dtype.itemsize)
        cap = max(128, min(2048, ((budget // per_col) // 128) * 128))
        tile_n = N if N <= cap else cap
    num_n_tiles = pl.cdiv(N, tile_n)

    tap_spec = pl.BlockSpec((None, C, tile_n), lambda b, n: (b, 0, n))
    in_specs = [pl.BlockSpec((9, Cout, C), lambda b, n: (0, 0, 0)),  # weights, resident
                pl.BlockSpec((Cout, 1), lambda b, n: (0, 0))]        # bias, resident
    in_specs += [tap_spec] * 9

    cost = pl.CostEstimate(
        flops=int(2 * B * Cout * K * N),
        transcendentals=0,
        bytes_accessed=int(9 * B * C * N * op_dtype.itemsize
                           + 9 * Cout * C * op_dtype.itemsize
                           + Cout * 4
                           + B * Cout * N * x.dtype.itemsize),
    )

    out = pl.pallas_call(
        _conv_kernel,
        out_shape=jax.ShapeDtypeStruct((B, Cout, N), x.dtype),
        grid_spec=pltpu.PrefetchScalarGridSpec(
            num_scalar_prefetch=0,
            grid=(B, num_n_tiles),
            in_specs=in_specs,
            out_specs=pl.BlockSpec((None, Cout, tile_n), lambda b, n: (b, 0, n)),
        ),
        compiler_params=pltpu.CompilerParams(
            dimension_semantics=("parallel", "parallel"),
            vmem_limit_bytes=vmem_limit_bytes,
            allow_input_fusion=[False, False] + [True] * 9,
        ),
        cost_estimate=cost,
    )(w3, b2, *taps)

    return out.reshape(B, Cout, Hout, Wout)


# ----------------------------------------------------------------------------
# use_conv=False path: AvgPool2d(kernel_size=2, stride=2)
# ----------------------------------------------------------------------------

def _avgpool_kernel(x_ref, p_ref, o_ref):
    # x_ref: (R, 2, W) row pairs; p_ref: (W, W2) 0/1 column pooling matrix.
    v = x_ref[...].astype(jnp.float32)                 # (R, 2, W)
    row_sum = v[:, 0, :] + v[:, 1, :]                  # (R, W)  -- VPU
    col = lax.dot_general(row_sum, p_ref[...].astype(jnp.float32), _MXU_DN,
                          preferred_element_type=jnp.float32)   # (R, W2) -- MXU
    o_ref[...] = (col * 0.25).astype(o_ref.dtype)


def downsample_avgpool2d(x: jax.Array, *, tile_rows: int | None = None,
                         vmem_limit_bytes: int = 48 * 1024 * 1024) -> jax.Array:
    B, C, H, W = x.shape
    H2, W2 = H // 2, W // 2
    # AvgPool2d(2,2) floor semantics: drop trailing odd row/col (no-op if even).
    x = x[:, :, :2 * H2, :2 * W2]
    W = 2 * W2

    rows = C * H2
    xr = x.reshape(B, rows, 2, W)                      # free contiguous reshape
    P = (jnp.arange(W, dtype=jnp.int32)[:, None] // 2
         == jnp.arange(W2, dtype=jnp.int32)[None, :]).astype(jnp.float32)

    itemsize = x.dtype.itemsize
    if tile_rows is None:
        budget = 12 * 1024 * 1024
        # conservative: the (R, 2, W) VMEM block pads the sublane dim 2 -> 8
        per_row = 2 * (8 * W * itemsize + W2 * itemsize)
        cap = max(8, min(1024, ((budget // per_row) // 8) * 8))
        tile_rows = rows if rows <= cap else cap
    num_row_tiles = pl.cdiv(rows, tile_rows)

    cost = pl.CostEstimate(
        flops=int(3 * B * rows * W),
        transcendentals=0,
        bytes_accessed=int(B * rows * 2 * W * itemsize + B * rows * W2 * itemsize),
    )

    out = pl.pallas_call(
        _avgpool_kernel,
        out_shape=jax.ShapeDtypeStruct((B, rows, W2), x.dtype),
        grid_spec=pltpu.PrefetchScalarGridSpec(
            num_scalar_prefetch=0,
            grid=(B, num_row_tiles),
            in_specs=[pl.BlockSpec((None, tile_rows, 2, W), lambda b, r: (b, r, 0, 0)),
                      pl.BlockSpec((W, W2), lambda b, r: (0, 0))],
            out_specs=pl.BlockSpec((None, tile_rows, W2), lambda b, r: (b, r, 0)),
        ),
        compiler_params=pltpu.CompilerParams(
            dimension_semantics=("parallel", "parallel"),
            vmem_limit_bytes=vmem_limit_bytes,
            allow_input_fusion=[True, False],
        ),
        cost_estimate=cost,
    )(xr, P)

    return out.reshape(B, C, H2, W2)


# ----------------------------------------------------------------------------
# Module-equivalent wrapper
# ----------------------------------------------------------------------------

def downsample(x: jax.Array, *, channels: int, use_conv: bool,
               out_channels: int | None = None,
               weight: jax.Array | None = None,
               bias: jax.Array | None = None,
               operand_dtype=None) -> jax.Array:
    """Equivalent of Downsample(channels, use_conv, dims=2, out_channels).forward(x)."""
    assert x.shape[1] == channels
    out_channels = out_channels or channels
    if use_conv:
        assert weight is not None and bias is not None
        assert weight.shape[0] == out_channels
        return downsample_conv2d(x, weight, bias, operand_dtype=operand_dtype)
    else:
        assert channels == out_channels
        return downsample_avgpool2d(x)


# ----------------------------------------------------------------------------
# Pure-JAX references mirroring the PyTorch forward
# ----------------------------------------------------------------------------

def _conv_reference(x, weight, bias):
    y = lax.conv_general_dilated(
        x, weight, window_strides=(2, 2), padding=((1, 1), (1, 1)),
        dimension_numbers=('NCHW', 'OIHW', 'NCHW'))
    return y + bias.reshape(1, -1, 1, 1)


def _avgpool_reference(x):
    s = lax.reduce_window(x, 0.0, lax.add,
                          window_dimensions=(1, 1, 2, 2),
                          window_strides=(1, 1, 2, 2),
                          padding='VALID')
    return s * 0.25


if __name__ == "__main__":
    key = jax.random.PRNGKey(0)
    k_x, k_w, k_b = jax.random.split(key, 3)

    B, C, H, W = 2, 4, 16, 16
    Cout = C
    x = jax.random.normal(k_x, (B, C, H, W), dtype=jnp.float32)
    weight = jax.random.normal(k_w, (Cout, C, 3, 3), dtype=jnp.float32) * 0.1
    bias = jax.random.normal(k_b, (Cout,), dtype=jnp.float32) * 0.1

    # use_conv=True path, f32 operands (bit-exact-ish vs reference)
    y_conv = jax.block_until_ready(
        downsample(x, channels=C, use_conv=True, out_channels=Cout,
                   weight=weight, bias=bias))
    y_conv_ref = _conv_reference(x, weight, bias)
    assert y_conv.shape == (B, Cout, H // 2, W // 2)
    assert jnp.allclose(y_conv, y_conv_ref, atol=1e-5, rtol=1e-5)

    # use_conv=True path, bf16 operands / f32 accumulation (bandwidth-friendly mode)
    y_conv_bf16 = jax.block_until_ready(
        downsample(x, channels=C, use_conv=True, out_channels=Cout,
                   weight=weight, bias=bias, operand_dtype=jnp.bfloat16))
    assert y_conv_bf16.shape == (B, Cout, H // 2, W // 2)
    assert jnp.allclose(y_conv_bf16, y_conv_ref, atol=3e-2, rtol=3e-2)

    # use_conv=False path
    y_pool = jax.block_until_ready(downsample(x, channels=C, use_conv=False))
    y_pool_ref = _avgpool_reference(x)
    assert y_pool.shape == (B, C, H // 2, W // 2)
    assert jnp.allclose(y_pool, y_pool_ref, atol=1e-5, rtol=1e-5)

    print("KERNEL_OK")
</pallas_src>

<mosaic_0001>
module attributes {stable_mosaic.version = 11 : i64} {
  func.func @_conv_kernel(%arg0: i32, %arg1: i32, %arg2: memref<9x4x4xf32, #tpu.memory_space<vmem>>, %arg3: memref<4x1xf32, #tpu.memory_space<vmem>>, %arg4: memref<1x4x64xf32, #tpu.memory_space<vmem>>, %arg5: memref<1x4x64xf32, #tpu.memory_space<vmem>>, %arg6: memref<1x4x64xf32, #tpu.memory_space<vmem>>, %arg7: memref<1x4x64xf32, #tpu.memory_space<vmem>>, %arg8: memref<1x4x64xf32, #tpu.memory_space<vmem>>, %arg9: memref<1x4x64xf32, #tpu.memory_space<vmem>>, %arg10: memref<1x4x64xf32, #tpu.memory_space<vmem>>, %arg11: memref<1x4x64xf32, #tpu.memory_space<vmem>>, %arg12: memref<1x4x64xf32, #tpu.memory_space<vmem>>, %arg13: memref<1x4x64xf32, #tpu.memory_space<vmem>>) attributes {dimension_semantics = [#tpu.dimension_semantics<parallel>, #tpu.dimension_semantics<parallel>], iteration_bounds = array<i64: 2, 1>, scalar_prefetch = 0 : i64, scratch_operands = 0 : i64, tpu.core_type = #tpu.core_type<tc>, window_params = [{pipeline_mode = #tpu.pipeline_mode<synchronous>, transform_indices = @transform_0, window_bounds = array<i64: 9, 4, 4>}, {pipeline_mode = #tpu.pipeline_mode<synchronous>, transform_indices = @transform_1, window_bounds = array<i64: 4, 1>}, {transform_indices = @transform_2, window_bounds = array<i64: 1, 4, 64>}, {transform_indices = @transform_3, window_bounds = array<i64: 1, 4, 64>}, {transform_indices = @transform_4, window_bounds = array<i64: 1, 4, 64>}, {transform_indices = @transform_5, window_bounds = array<i64: 1, 4, 64>}, {transform_indices = @transform_6, window_bounds = array<i64: 1, 4, 64>}, {transform_indices = @transform_7, window_bounds = array<i64: 1, 4, 64>}, {transform_indices = @transform_8, window_bounds = array<i64: 1, 4, 64>}, {transform_indices = @transform_9, window_bounds = array<i64: 1, 4, 64>}, {transform_indices = @transform_10, window_bounds = array<i64: 1, 4, 64>}, {transform_indices = @transform_11, window_bounds = array<i64: 1, 4, 64>}]} {
    %c0 = arith.constant 0 : index
    %c0_0 = arith.constant 0 : index
    %c0_1 = arith.constant 0 : index
    %0 = vector.load %arg2[%c0, %c0_0, %c0_1] : memref<9x4x4xf32, #tpu.memory_space<vmem>>, vector<1x4x4xf32>
    %1 = vector.shape_cast %0 : vector<1x4x4xf32> to vector<4x4xf32>
    %c0_2 = arith.constant 0 : index
    %c0_3 = arith.constant 0 : index
    %c0_4 = arith.constant 0 : index
    %2 = vector.load %arg4[%c0_2, %c0_3, %c0_4] : memref<1x4x64xf32, #tpu.memory_space<vmem>>, vector<1x4x64xf32>
    %3 = vector.shape_cast %2 : vector<1x4x64xf32> to vector<4x64xf32>
    %cst = arith.constant dense<0.000000e+00> : vector<4x64xf32>
    %4 = tpu.matmul %1, %3, %cst {dimension_numbers = #tpu.dot_dimension_numbers<[1], [0], [0], [1], [0, 0, 1, 1], [], []>} : vector<4x4xf32>, vector<4x64xf32>, vector<4x64xf32> -> vector<4x64xf32>
    %c1 = arith.constant 1 : index
    %c0_5 = arith.constant 0 : index
    %c0_6 = arith.constant 0 : index
    %5 = vector.load %arg2[%c1, %c0_5, %c0_6] : memref<9x4x4xf32, #tpu.memory_space<vmem>>, vector<1x4x4xf32>
    %6 = vector.shape_cast %5 : vector<1x4x4xf32> to vector<4x4xf32>
    %c0_7 = arith.constant 0 : index
    %c0_8 = arith.constant 0 : index
    %c0_9 = arith.constant 0 : index
    %7 = vector.load %arg5[%c0_7, %c0_8, %c0_9] : memref<1x4x64xf32, #tpu.memory_space<vmem>>, vector<1x4x64xf32>
    %8 = vector.shape_cast %7 : vector<1x4x64xf32> to vector<4x64xf32>
    %cst_10 = arith.constant dense<0.000000e+00> : vector<4x64xf32>
    %9 = tpu.matmul %6, %8, %cst_10 {dimension_numbers = #tpu.dot_dimension_numbers<[1], [0], [0], [1], [0, 0, 1, 1], [], []>} : vector<4x4xf32>, vector<4x64xf32>, vector<4x64xf32> -> vector<4x64xf32>
    %10 = arith.addf %4, %9 : vector<4x64xf32>
    %c2 = arith.constant 2 : index
    %c0_11 = arith.constant 0 : index
    %c0_12 = arith.constant 0 : index
    %11 = vector.load %arg2[%c2, %c0_11, %c0_12] : memref<9x4x4xf32, #tpu.memory_space<vmem>>, vector<1x4x4xf32>
    %12 = vector.shape_cast %11 : vector<1x4x4xf32> to vector<4x4xf32>
    %c0_13 = arith.constant 0 : index
    %c0_14 = arith.constant 0 : index
    %c0_15 = arith.constant 0 : index
    %13 = vector.load %arg6[%c0_13, %c0_14, %c0_15] : memref<1x4x64xf32, #tpu.memory_space<vmem>>, vector<1x4x64xf32>
    %14 = vector.shape_cast %13 : vector<1x4x64xf32> to vector<4x64xf32>
    %cst_16 = arith.constant dense<0.000000e+00> : vector<4x64xf32>
    %15 = tpu.matmul %12, %14, %cst_16 {dimension_numbers = #tpu.dot_dimension_numbers<[1], [0], [0], [1], [0, 0, 1, 1], [], []>} : vector<4x4xf32>, vector<4x64xf32>, vector<4x64xf32> -> vector<4x64xf32>
    %16 = arith.addf %10, %15 : vector<4x64xf32>
    %c3 = arith.constant 3 : index
    %c0_17 = arith.constant 0 : index
    %c0_18 = arith.constant 0 : index
    %17 = vector.load %arg2[%c3, %c0_17, %c0_18] : memref<9x4x4xf32, #tpu.memory_space<vmem>>, vector<1x4x4xf32>
    %18 = vector.shape_cast %17 : vector<1x4x4xf32> to vector<4x4xf32>
    %c0_19 = arith.constant 0 : index
    %c0_20 = arith.constant 0 : index
    %c0_21 = arith.constant 0 : index
    %19 = vector.load %arg7[%c0_19, %c0_20, %c0_21] : memref<1x4x64xf32, #tpu.memory_space<vmem>>, vector<1x4x64xf32>
    %20 = vector.shape_cast %19 : vector<1x4x64xf32> to vector<4x64xf32>
    %cst_22 = arith.constant dense<0.000000e+00> : vector<4x64xf32>
    %21 = tpu.matmul %18, %20, %cst_22 {dimension_numbers = #tpu.dot_dimension_numbers<[1], [0], [0], [1], [0, 0, 1, 1], [], []>} : vector<4x4xf32>, vector<4x64xf32>, vector<4x64xf32> -> vector<4x64xf32>
    %22 = arith.addf %16, %21 : vector<4x64xf32>
    %c4 = arith.constant 4 : index
    %c0_23 = arith.constant 0 : index
    %c0_24 = arith.constant 0 : index
    %23 = vector.load %arg2[%c4, %c0_23, %c0_24] : memref<9x4x4xf32, #tpu.memory_space<vmem>>, vector<1x4x4xf32>
    %24 = vector.shape_cast %23 : vector<1x4x4xf32> to vector<4x4xf32>
    %c0_25 = arith.constant 0 : index
    %c0_26 = arith.constant 0 : index
    %c0_27 = arith.constant 0 : index
    %25 = vector.load %arg8[%c0_25, %c0_26, %c0_27] : memref<1x4x64xf32, #tpu.memory_space<vmem>>, vector<1x4x64xf32>
    %26 = vector.shape_cast %25 : vector<1x4x64xf32> to vector<4x64xf32>
    %cst_28 = arith.constant dense<0.000000e+00> : vector<4x64xf32>
    %27 = tpu.matmul %24, %26, %cst_28 {dimension_numbers = #tpu.dot_dimension_numbers<[1], [0], [0], [1], [0, 0, 1, 1], [], []>} : vector<4x4xf32>, vector<4x64xf32>, vector<4x64xf32> -> vector<4x64xf32>
    %28 = arith.addf %22, %27 : vector<4x64xf32>
    %c5 = arith.constant 5 : index
    %c0_29 = arith.constant 0 : index
    %c0_30 = arith.constant 0 : index
    %29 = vector.load %arg2[%c5, %c0_29, %c0_30] : memref<9x4x4xf32, #tpu.memory_space<vmem>>, vector<1x4x4xf32>
    %30 = vector.shape_cast %29 : vector<1x4x4xf32> to vector<4x4xf32>
    %c0_31 = arith.constant 0 : index
    %c0_32 = arith.constant 0 : index
    %c0_33 = arith.constant 0 : index
    %31 = vector.load %arg9[%c0_31, %c0_32, %c0_33] : memref<1x4x64xf32, #tpu.memory_space<vmem>>, vector<1x4x64xf32>
    %32 = vector.shape_cast %31 : vector<1x4x64xf32> to vector<4x64xf32>
    %cst_34 = arith.constant dense<0.000000e+00> : vector<4x64xf32>
    %33 = tpu.matmul %30, %32, %cst_34 {dimension_numbers = #tpu.dot_dimension_numbers<[1], [0], [0], [1], [0, 0, 1, 1], [], []>} : vector<4x4xf32>, vector<4x64xf32>, vector<4x64xf32> -> vector<4x64xf32>
    %34 = arith.addf %28, %33 : vector<4x64xf32>
    %c6 = arith.constant 6 : index
    %c0_35 = arith.constant 0 : index
    %c0_36 = arith.constant 0 : index
    %35 = vector.load %arg2[%c6, %c0_35, %c0_36] : memref<9x4x4xf32, #tpu.memory_space<vmem>>, vector<1x4x4xf32>
    %36 = vector.shape_cast %35 : vector<1x4x4xf32> to vector<4x4xf32>
    %c0_37 = arith.constant 0 : index
    %c0_38 = arith.constant 0 : index
    %c0_39 = arith.constant 0 : index
    %37 = vector.load %arg10[%c0_37, %c0_38, %c0_39] : memref<1x4x64xf32, #tpu.memory_space<vmem>>, vector<1x4x64xf32>
    %38 = vector.shape_cast %37 : vector<1x4x64xf32> to vector<4x64xf32>
    %cst_40 = arith.constant dense<0.000000e+00> : vector<4x64xf32>
    %39 = tpu.matmul %36, %38, %cst_40 {dimension_numbers = #tpu.dot_dimension_numbers<[1], [0], [0], [1], [0, 0, 1, 1], [], []>} : vector<4x4xf32>, vector<4x64xf32>, vector<4x64xf32> -> vector<4x64xf32>
    %40 = arith.addf %34, %39 : vector<4x64xf32>
    %c7 = arith.constant 7 : index
    %c0_41 = arith.constant 0 : index
    %c0_42 = arith.constant 0 : index
    %41 = vector.load %arg2[%c7, %c0_41, %c0_42] : memref<9x4x4xf32, #tpu.memory_space<vmem>>, vector<1x4x4xf32>
    %42 = vector.shape_cast %41 : vector<1x4x4xf32> to vector<4x4xf32>
    %c0_43 = arith.constant 0 : index
    %c0_44 = arith.constant 0 : index
    %c0_45 = arith.constant 0 : index
    %43 = vector.load %arg11[%c0_43, %c0_44, %c0_45] : memref<1x4x64xf32, #tpu.memory_space<vmem>>, vector<1x4x64xf32>
    %44 = vector.shape_cast %43 : vector<1x4x64xf32> to vector<4x64xf32>
    %cst_46 = arith.constant dense<0.000000e+00> : vector<4x64xf32>
    %45 = tpu.matmul %42, %44, %cst_46 {dimension_numbers = #tpu.dot_dimension_numbers<[1], [0], [0], [1], [0, 0, 1, 1], [], []>} : vector<4x4xf32>, vector<4x64xf32>, vector<4x64xf32> -> vector<4x64xf32>
    %46 = arith.addf %40, %45 : vector<4x64xf32>
    %c8 = arith.constant 8 : index
    %c0_47 = arith.constant 0 : index
    %c0_48 = arith.constant 0 : index
    %47 = vector.load %arg2[%c8, %c0_47, %c0_48] : memref<9x4x4xf32, #tpu.memory_space<vmem>>, vector<1x4x4xf32>
    %48 = vector.shape_cast %47 : vector<1x4x4xf32> to vector<4x4xf32>
    %c0_49 = arith.constant 0 : index
    %c0_50 = arith.constant 0 : index
    %c0_51 = arith.constant 0 : index
    %49 = vector.load %arg12[%c0_49, %c0_50, %c0_51] : memref<1x4x64xf32, #tpu.memory_space<vmem>>, vector<1x4x64xf32>
    %50 = vector.shape_cast %49 : vector<1x4x64xf32> to vector<4x64xf32>
    %cst_52 = arith.constant dense<0.000000e+00> : vector<4x64xf32>
    %51 = tpu.matmul %48, %50, %cst_52 {dimension_numbers = #tpu.dot_dimension_numbers<[1], [0], [0], [1], [0, 0, 1, 1], [], []>} : vector<4x4xf32>, vector<4x64xf32>, vector<4x64xf32> -> vector<4x64xf32>
    %52 = arith.addf %46, %51 : vector<4x64xf32>
    %c0_53 = arith.constant 0 : index
    %c0_54 = arith.constant 0 : index
    %53 = vector.load %arg3[%c0_53, %c0_54] : memref<4x1xf32, #tpu.memory_space<vmem>>, vector<4x1xf32>
    %54 = vector.broadcast %53 : vector<4x1xf32> to vector<4x64xf32>
    %55 = arith.addf %52, %54 : vector<4x64xf32>
    %c0_55 = arith.constant 0 : index
    %c0_56 = arith.constant 0 : index
    %c0_57 = arith.constant 0 : index
    %56 = vector.load %arg13[%c0_55, %c0_56, %c0_57] : memref<1x4x64xf32, #tpu.memory_space<vmem>>, vector<1x4x64xf32>
    %57 = vector.shape_cast %56 : vector<1x4x64xf32> to vector<4x64xf32>
    %58 = vector.shape_cast %55 : vector<4x64xf32> to vector<1x4x64xf32>
    tpu.vector_store %arg13[%c0_55, %c0_56, %c0_57], %58 {strides = array<i32>} : memref<1x4x64xf32, #tpu.memory_space<vmem>>, vector<1x4x64xf32>,
    return
  }
  func.func @transform_0(%arg0: i32, %arg1: i32) -> (i32, i32, i32) {
    %c0_i32 = arith.constant 0 : i32
    %c0_i32_0 = arith.constant 0 : i32
    %c0_i32_1 = arith.constant 0 : i32
    %c0_i32_2 = arith.constant 0 : i32
    return %c0_i32, %c0_i32_0, %c0_i32_1 : i32, i32, i32
  }
  func.func @transform_1(%arg0: i32, %arg1: i32) -> (i32, i32) {
    %c0_i32 = arith.constant 0 : i32
    %c0_i32_0 = arith.constant 0 : i32
    %c0_i32_1 = arith.constant 0 : i32
    return %c0_i32, %c0_i32_0 : i32, i32
  }
  func.func @transform_2(%arg0: i32, %arg1: i32) -> (i32, i32, i32) {
    %c0_i32 = arith.constant 0 : i32
    %c0_i32_0 = arith.constant 0 : i32
    return %arg0, %c0_i32, %arg1 : i32, i32, i32
  }
  func.func @transform_3(%arg0: i32, %arg1: i32) -> (i32, i32, i32) {
    %c0_i32 = arith.constant 0 : i32
    %c0_i32_0 = arith.constant 0 : i32
    return %arg0, %c0_i32, %arg1 : i32, i32, i32
  }
  func.func @transform_4(%arg0: i32, %arg1: i32) -> (i32, i32, i32) {
    %c0_i32 = arith.constant 0 : i32
    %c0_i32_0 = arith.constant 0 : i32
    return %arg0, %c0_i32, %arg1 : i32, i32, i32
  }
  func.func @transform_5(%arg0: i32, %arg1: i32) -> (i32, i32, i32) {
    %c0_i32 = arith.constant 0 : i32
    %c0_i32_0 = arith.constant 0 : i32
    return %arg0, %c0_i32, %arg1 : i32, i32, i32
  }
  func.func @transform_6(%arg0: i32, %arg1: i32) -> (i32, i32, i32) {
    %c0_i32 = arith.constant 0 : i32
    %c0_i32_0 = arith.constant 0 : i32
    return %arg0, %c0_i32, %arg1 : i32, i32, i32
  }
  func.func @transform_7(%arg0: i32, %arg1: i32) -> (i32, i32, i32) {
    %c0_i32 = arith.constant 0 : i32
    %c0_i32_0 = arith.constant 0 : i32
    return %arg0, %c0_i32, %arg1 : i32, i32, i32
  }
  func.func @transform_8(%arg0: i32, %arg1: i32) -> (i32, i32, i32) {
    %c0_i32 = arith.constant 0 : i32
    %c0_i32_0 = arith.constant 0 : i32
    return %arg0, %c0_i32, %arg1 : i32, i32, i32
  }
  func.func @transform_9(%arg0: i32, %arg1: i32) -> (i32, i32, i32) {
    %c0_i32 = arith.constant 0 : i32
    %c0_i32_0 = arith.constant 0 : i32
    return %arg0, %c0_i32, %arg1 : i32, i32, i32
  }
  func.func @transform_10(%arg0: i32, %arg1: i32) -> (i32, i32, i32) {
    %c0_i32 = arith.constant 0 : i32
    %c0_i32_0 = arith.constant 0 : i32
    return %arg0, %c0_i32, %arg1 : i32, i32, i32
  }
  func.func @transform_11(%arg0: i32, %arg1: i32) -> (i32, i32, i32) {
    %c0_i32 = arith.constant 0 : i32
    %c0_i32_0 = arith.constant 0 : i32
    return %arg0, %c0_i32, %arg1 : i32, i32, i32
  }
}

</mosaic_0001>

<llo_original>
// kernel: tpu_custom_call.1
$region0: #{tpu_custom_call.1}
  #allocation0 [shape = 'u32[]', space=smem, size = 0x4, offset = 0x4, fixed_abs, tag = 'smem constant byte address 0x4 - core index']
  #allocation1 [shape = 'u32[144,128]{1,0:T(1,128)}', space=vmem, size = 0x12000, scoped, tag = 'internal scratch']
  %s0 = inlined_call_operand.vmem [shape: f32[9,4,4], index: 0, kind: input, shape index: {}]
  %s1 = inlined_call_operand.vmem [shape: f32[4,1], index: 1, kind: input, shape index: {}]
  %s2 = inlined_call_operand.vmem [shape: f32[2,4,64], index: 2, kind: input, shape index: {}]
  %s3 = inlined_call_operand.vmem [shape: f32[2,4,64], index: 3, kind: input, shape index: {}]
  %s4 = inlined_call_operand.vmem [shape: f32[2,4,64], index: 4, kind: input, shape index: {}]
  %s5 = inlined_call_operand.vmem [shape: f32[2,4,64], index: 5, kind: input, shape index: {}]
  %s6 = inlined_call_operand.vmem [shape: f32[2,4,64], index: 6, kind: input, shape index: {}]
  %s7 = inlined_call_operand.vmem [shape: f32[2,4,64], index: 7, kind: input, shape index: {}]
  %s8 = inlined_call_operand.vmem [shape: f32[2,4,64], index: 8, kind: input, shape index: {}]
  %s9 = inlined_call_operand.vmem [shape: f32[2,4,64], index: 9, kind: input, shape index: {}]
  %s10 = inlined_call_operand.vmem [shape: f32[2,4,64], index: 10, kind: input, shape index: {}]
  %s11 = inlined_call_operand.hbm [shape: f32[2,4,64], index: 11, kind: output, shape index: {}]
  %s12 = sld [smem:[#allocation0]]
  $region77: #{tpu_custom_call.1} parent=0
    _
  %s14 = ssub.s32 1, %s12
  %s15 = scalar_select 0, %s14, %s12
  $region1: #{tpu_custom_call.1} parent=0
    #allocation2 [shape = 'u8[4096]{0}', space=vmem, size = 0x1000, scoped, tag = 'output window, operand 0']
    #allocation3 [shape = 's32[2]{0}', space=sflag, size = 0x8, scoped, tag = 'scoped memory for tpu_custom_call.1']
    %16 = vsyncpa [#allocation3], 0
    %s17 = scalar_lea.sflag [#allocation3], 1
    %18 = vsyncpa %s17, 0
    loop: start=0, step=1, limit=4
    $region2: #{tpu_custom_call.1} parent=1 // loop_pre_header
      _
    $region3: #{tpu_custom_call.1} parent=1 // loop_header
      %s20 = sphi 0, %s24
      %p21 = scmp.ge.s32.totalorder %s20, 4
      %s27 = sphi 0, %s39
      %s28 = sphi 0, %s35
      %s29 = sphi 0, %s27
      %s30 = sphi 0, %s28
      %s31 = sphi 0, %s29
      %s32 = sphi 0, %s30
      %s40 = sphi 0, %s40
      %s42 = sphi 0, %s40
      %s43 = sphi 0, %s42
      %s57 = sphi 0, %s43
      %s61 = sphi 0, %s61
      %s63 = sphi 0, %s61
      %s64 = sphi 0, %s63
      %s78 = sphi 0, %s64
      %s86 = sphi 0, %s88
      %s89 = sphi 0, %s86
      %s90 = sphi 0, %s89
      %s106 = sphi 0, %s90
      %s114 = sphi 0, %s116
      %s117 = sphi 0, %s114
      %s118 = sphi 0, %s117
      %s134 = sphi 0, %s118
      %s142 = sphi 0, %s144
      %s145 = sphi 0, %s142
      %s146 = sphi 0, %s145
      %s162 = sphi 0, %s146
      %s170 = sphi 0, %s172
      %s173 = sphi 0, %s170
      %s174 = sphi 0, %s173
      %s190 = sphi 0, %s174
      %s198 = sphi 0, %s200
      %s201 = sphi 0, %s198
      %s202 = sphi 0, %s201
      %s218 = sphi 0, %s202
      %s226 = sphi 0, %s228
      %s229 = sphi 0, %s226
      %s230 = sphi 0, %s229
      %s246 = sphi 0, %s230
      %s254 = sphi 0, %s256
      %s257 = sphi 0, %s254
      %s258 = sphi 0, %s257
      %s274 = sphi 0, %s258
      %s282 = sphi 0, %s284
      %s285 = sphi 0, %s282
      %s286 = sphi 0, %s285
      %s302 = sphi 0, %s286
      %s310 = sphi 0, %s312
      %s313 = sphi 0, %s310
      %s314 = sphi 0, %s313
      %s330 = sphi 0, %s314
      %s338 = sphi 0, %s340
      %s341 = sphi 0, %s338
      %s342 = sphi 0, %s341
      %s358 = sphi 0, %s342
    $region4: #{tpu_custom_call.1} parent=1 // loop_header_branch
      %23 = sbr.rel (%p21) target = $region8
    $region5: #{tpu_custom_call.1} parent=1 // loop_body
      %s25 = ssub.s32 %s20, 1
      %s26 = ssub.s32 %s20, 2
      %s33 = sadd.s32 1, %s28
      %p34 = scmp.ge.s32.totalorder %s33, 1
      %s35 = scalar_select %p34, 0, %s33
      %s36 = sadd.s32 1, %s27
      %s37 = scalar_select %p34, %s36, %s27
      %p38 = scmp.ge.s32.totalorder %s37, 2
      %s39 = scalar_select %p38, 0, %s37
      %s41 = sadd.s32 %s40, 1
      %p44 = scmp.eq.s32.totalorder %s20, 1
      %p45 = scmp.ne.s32.totalorder %s40, %s42
      %p46 = scmp.eq.s32.totalorder %s20, 0
      %p47 = por %p45, %p46
      %p48 = scmp.ne.s32.totalorder %s40, %s42
      %p49 = scmp.eq.s32.totalorder %s25, 1
      %p50 = por %p48, %p49
      %p51 = scmp.ne.s32.totalorder %s42, %s43
      %p52 = scmp.eq.s32.totalorder %s25, 0
      %p53 = por %p51, %p52
      %p54 = scmp.ne.s32.totalorder %s42, %s43
      %p55 = scmp.eq.s32.totalorder %s26, 1
      %p56 = por %p54, %p55
      %p58 = scmp.ne.s32.totalorder %s43, %s57
      %p59 = scmp.eq.s32.totalorder %s26, 0
      %p60 = por %p58, %p59
      %s62 = sadd.s32 %s61, 1
      %p65 = scmp.eq.s32.totalorder %s20, 1
      %p66 = scmp.ne.s32.totalorder %s61, %s63
      %p67 = scmp.eq.s32.totalorder %s20, 0
      %p68 = por %p66, %p67
      %p69 = scmp.ne.s32.totalorder %s61, %s63
      %p70 = scmp.eq.s32.totalorder %s25, 1
      %p71 = por %p69, %p70
      %p72 = scmp.ne.s32.totalorder %s63, %s64
      %p73 = scmp.eq.s32.totalorder %s25, 0
      %p74 = por %p72, %p73
      %p75 = scmp.ne.s32.totalorder %s63, %s64
      %p76 = scmp.eq.s32.totalorder %s26, 1
      %p77 = por %p75, %p76
      %p79 = scmp.ne.s32.totalorder %s64, %s78
      %p80 = scmp.eq.s32.totalorder %s26, 0
      %p81 = por %p79, %p80
      %s82 = ssub.s32 %s27, %s39
      %s83 = ssub.s32 %s28, %s35
      %s84 = sor.u32 %s82, %s83
      %p85 = scmp.eq.s32.totalorder %s84, 0
      %s87 = sadd.s32 %s86, 1
      %s88 = scalar_select %p85, %s86, %s87
      %p91 = pneg %p85
      %p92 = scmp.eq.s32.totalorder %s20, 1
      %p93 = por %p91, %p92
      %p94 = scmp.ne.s32.totalorder %s86, %s89
      %p95 = scmp.eq.s32.totalorder %s20, 0
      %p96 = por %p94, %p95
      %p97 = scmp.ne.s32.totalorder %s86, %s89
      %p98 = scmp.eq.s32.totalorder %s25, 1
      %p99 = por %p97, %p98
      %p100 = scmp.ne.s32.totalorder %s89, %s90
      %p101 = scmp.eq.s32.totalorder %s25, 0
      %p102 = por %p100, %p101
      %p103 = scmp.ne.s32.totalorder %s89, %s90
      %p104 = scmp.eq.s32.totalorder %s26, 1
      %p105 = por %p103, %p104
      %p107 = scmp.ne.s32.totalorder %s90, %s106
      %p108 = scmp.eq.s32.totalorder %s26, 0
      %p109 = por %p107, %p108
      %s110 = ssub.s32 %s27, %s39
      %s111 = ssub.s32 %s28, %s35
      %s112 = sor.u32 %s110, %s111
      %p113 = scmp.eq.s32.totalorder %s112, 0
      %s115 = sadd.s32 %s114, 1
      %s116 = scalar_select %p113, %s114, %s115
      %p119 = pneg %p113
      %p120 = scmp.eq.s32.totalorder %s20, 1
      %p121 = por %p119, %p120
      %p122 = scmp.ne.s32.totalorder %s114, %s117
      %p123 = scmp.eq.s32.totalorder %s20, 0
      %p124 = por %p122, %p123
      %p125 = scmp.ne.s32.totalorder %s114, %s117
      %p126 = scmp.eq.s32.totalorder %s25, 1
      %p127 = por %p125, %p126
      %p128 = scmp.ne.s32.totalorder %s117, %s118
      %p129 = scmp.eq.s32.totalorder %s25, 0
      %p130 = por %p128, %p129
      %p131 = scmp.ne.s32.totalorder %s117, %s118
      %p132 = scmp.eq.s32.totalorder %s26, 1
      %p133 = por %p131, %p132
      %p135 = scmp.ne.s32.totalorder %s118, %s134
      %p136 = scmp.eq.s32.totalorder %s26, 0
      %p137 = por %p135, %p136
      %s138 = ssub.s32 %s27, %s39
      %s139 = ssub.s32 %s28, %s35
      %s140 = sor.u32 %s138, %s139
      %p141 = scmp.eq.s32.totalorder %s140, 0
      %s143 = sadd.s32 %s142, 1
      %s144 = scalar_select %p141, %s142, %s143
      %p147 = pneg %p141
      %p148 = scmp.eq.s32.totalorder %s20, 1
      %p149 = por %p147, %p148
      %p150 = scmp.ne.s32.totalorder %s142, %s145
      %p151 = scmp.eq.s32.totalorder %s20, 0
      %p152 = por %p150, %p151
      %p153 = scmp.ne.s32.totalorder %s142, %s145
      %p154 = scmp.eq.s32.totalorder %s25, 1
      %p155 = por %p153, %p154
      %p156 = scmp.ne.s32.totalorder %s145, %s146
      %p157 = scmp.eq.s32.totalorder %s25, 0
      %p158 = por %p156, %p157
      %p159 = scmp.ne.s32.totalorder %s145, %s146
      %p160 = scmp.eq.s32.totalorder %s26, 1
      %p161 = por %p159, %p160
      %p163 = scmp.ne.s32.totalorder %s146, %s162
      %p164 = scmp.eq.s32.totalorder %s26, 0
      %p165 = por %p163, %p164
      %s166 = ssub.s32 %s27, %s39
      %s167 = ssub.s32 %s28, %s35
      %s168 = sor.u32 %s166, %s167
      %p169 = scmp.eq.s32.totalorder %s168, 0
      %s171 = sadd.s32 %s170, 1
      %s172 = scalar_select %p169, %s170, %s171
      %p175 = pneg %p169
      %p176 = scmp.eq.s32.totalorder %s20, 1
      %p177 = por %p175, %p176
      %p178 = scmp.ne.s32.totalorder %s170, %s173
      %p179 = scmp.eq.s32.totalorder %s20, 0
      %p180 = por %p178, %p179
      %p181 = scmp.ne.s32.totalorder %s170, %s173
      %p182 = scmp.eq.s32.totalorder %s25, 1
      %p183 = por %p181, %p182
      %p184 = scmp.ne.s32.totalorder %s173, %s174
      %p185 = scmp.eq.s32.totalorder %s25, 0
      %p186 = por %p184, %p185
      %p187 = scmp.ne.s32.totalorder %s173, %s174
      %p188 = scmp.eq.s32.totalorder %s26, 1
      %p189 = por %p187, %p188
      %p191 = scmp.ne.s32.totalorder %s174, %s190
      %p192 = scmp.eq.s32.totalorder %s26, 0
      %p193 = por %p191, %p192
      %s194 = ssub.s32 %s27, %s39
      %s195 = ssub.s32 %s28, %s35
      %s196 = sor.u32 %s194, %s195
      %p197 = scmp.eq.s32.totalorder %s196, 0
      %s199 = sadd.s32 %s198, 1
      %s200 = scalar_select %p197, %s198, %s199
      %p203 = pneg %p197
      %p204 = scmp.eq.s32.totalorder %s20, 1
      %p205 = por %p203, %p204
      %p206 = scmp.ne.s32.totalorder %s198, %s201
      %p207 = scmp.eq.s32.totalorder %s20, 0
      %p208 = por %p206, %p207
      %p209 = scmp.ne.s32.totalorder %s198, %s201
      %p210 = scmp.eq.s32.totalorder %s25, 1
      %p211 = por %p209, %p210
      %p212 = scmp.ne.s32.totalorder %s201, %s202
      %p213 = scmp.eq.s32.totalorder %s25, 0
      %p214 = por %p212, %p213
      %p215 = scmp.ne.s32.totalorder %s201, %s202
      %p216 = scmp.eq.s32.totalorder %s26, 1
      %p217 = por %p215, %p216
      %p219 = scmp.ne.s32.totalorder %s202, %s218
      %p220 = scmp.eq.s32.totalorder %s26, 0
      %p221 = por %p219, %p220
      %s222 = ssub.s32 %s27, %s39
      %s223 = ssub.s32 %s28, %s35
      %s224 = sor.u32 %s222, %s223
      %p225 = scmp.eq.s32.totalorder %s224, 0
      %s227 = sadd.s32 %s226, 1
      %s228 = scalar_select %p225, %s226, %s227
      %p231 = pneg %p225
      %p232 = scmp.eq.s32.totalorder %s20, 1
      %p233 = por %p231, %p232
      %p234 = scmp.ne.s32.totalorder %s226, %s229
      %p235 = scmp.eq.s32.totalorder %s20, 0
      %p236 = por %p234, %p235
      %p237 = scmp.ne.s32.totalorder %s226, %s229
      %p238 = scmp.eq.s32.totalorder %s25, 1
      %p239 = por %p237, %p238
      %p240 = scmp.ne.s32.totalorder %s229, %s230
      %p241 = scmp.eq.s32.totalorder %s25, 0
      %p242 = por %p240, %p241
      %p243 = scmp.ne.s32.totalorder %s229, %s230
      %p244 = scmp.eq.s32.totalorder %s26, 1
      %p245 = por %p243, %p244
      %p247 = scmp.ne.s32.totalorder %s230, %s246
      %p248 = scmp.eq.s32.totalorder %s26, 0
      %p249 = por %p247, %p248
      %s250 = ssub.s32 %s27, %s39
      %s251 = ssub.s32 %s28, %s35
      %s252 = sor.u32 %s250, %s251
      %p253 = scmp.eq.s32.totalorder %s252, 0
      %s255 = sadd.s32 %s254, 1
      %s256 = scalar_select %p253, %s254, %s255
      %p259 = pneg %p253
      %p260 = scmp.eq.s32.totalorder %s20, 1
      %p261 = por %p259, %p260
      %p262 = scmp.ne.s32.totalorder %s254, %s257
      %p263 = scmp.eq.s32.totalorder %s20, 0
      %p264 = por %p262, %p263
      %p265 = scmp.ne.s32.totalorder %s254, %s257
      %p266 = scmp.eq.s32.totalorder %s25, 1
      %p267 = por %p265, %p266
      %p268 = scmp.ne.s32.totalorder %s257, %s258
      %p269 = scmp.eq.s32.totalorder %s25, 0
      %p270 = por %p268, %p269
      %p271 = scmp.ne.s32.totalorder %s257, %s258
      %p272 = scmp.eq.s32.totalorder %s26, 1
      %p273 = por %p271, %p272
      %p275 = scmp.ne.s32.totalorder %s258, %s274
      %p276 = scmp.eq.s32.totalorder %s26, 0
      %p277 = por %p275, %p276
      %s278 = ssub.s32 %s27, %s39
      %s279 = ssub.s32 %s28, %s35
      %s280 = sor.u32 %s278, %s279
      %p281 = scmp.eq.s32.totalorder %s280, 0
      %s283 = sadd.s32 %s282, 1
      %s284 = scalar_select %p281, %s282, %s283
      %p287 = pneg %p281
      %p288 = scmp.eq.s32.totalorder %s20, 1
      %p289 = por %p287, %p288
      %p290 = scmp.ne.s32.totalorder %s282, %s285
      %p291 = scmp.eq.s32.totalorder %s20, 0
      %p292 = por %p290, %p291
      %p293 = scmp.ne.s32.totalorder %s282, %s285
      %p294 = scmp.eq.s32.totalorder %s25, 1
      %p295 = por %p293, %p294
      %p296 = scmp.ne.s32.totalorder %s285, %s286
      %p297 = scmp.eq.s32.totalorder %s25, 0
      %p298 = por %p296, %p297
      %p299 = scmp.ne.s32.totalorder %s285, %s286
      %p300 = scmp.eq.s32.totalorder %s26, 1
      %p301 = por %p299, %p300
      %p303 = scmp.ne.s32.totalorder %s286, %s302
      %p304 = scmp.eq.s32.totalorder %s26, 0
      %p305 = por %p303, %p304
      %s306 = ssub.s32 %s27, %s39
      %s307 = ssub.s32 %s28, %s35
      %s308 = sor.u32 %s306, %s307
      %p309 = scmp.eq.s32.totalorder %s308, 0
      %s311 = sadd.s32 %s310, 1
      %s312 = scalar_select %p309, %s310, %s311
      %p315 = pneg %p309
      %p316 = scmp.eq.s32.totalorder %s20, 1
      %p317 = por %p315, %p316
      %p318 = scmp.ne.s32.totalorder %s310, %s313
      %p319 = scmp.eq.s32.totalorder %s20, 0
      %p320 = por %p318, %p319
      %p321 = scmp.ne.s32.totalorder %s310, %s313
      %p322 = scmp.eq.s32.totalorder %s25, 1
      %p323 = por %p321, %p322
      %p324 = scmp.ne.s32.totalorder %s313, %s314
      %p325 = scmp.eq.s32.totalorder %s25, 0
      %p326 = por %p324, %p325
      %p327 = scmp.ne.s32.totalorder %s313, %s314
      %p328 = scmp.eq.s32.totalorder %s26, 1
      %p329 = por %p327, %p328
      %p331 = scmp.ne.s32.totalorder %s314, %s330
      %p332 = scmp.eq.s32.totalorder %s26, 0
      %p333 = por %p331, %p332
      %s334 = ssub.s32 %s27, %s39
      %s335 = ssub.s32 %s28, %s35
      %s336 = sor.u32 %s334, %s335
      %p337 = scmp.eq.s32.totalorder %s336, 0
      %s339 = sadd.s32 %s338, 1
      %s340 = scalar_select %p337, %s338, %s339
      %p343 = pneg %p337
      %p344 = scmp.eq.s32.totalorder %s20, 1
      %p345 = por %p343, %p344
      %p346 = scmp.ne.s32.totalorder %s338, %s341
      %p347 = scmp.eq.s32.totalorder %s20, 0
      %p348 = por %p346, %p347
      %p349 = scmp.ne.s32.totalorder %s338, %s341
      %p350 = scmp.eq.s32.totalorder %s25, 1
      %p351 = por %p349, %p350
      %p352 = scmp.ne.s32.totalorder %s341, %s342
      %p353 = scmp.eq.s32.totalorder %s25, 0
      %p354 = por %p352, %p353
      %p355 = scmp.ne.s32.totalorder %s341, %s342
      %p356 = scmp.eq.s32.totalorder %s26, 1
      %p357 = por %p355, %p356
      %p359 = scmp.ne.s32.totalorder %s342, %s358
      %p360 = scmp.eq.s32.totalorder %s26, 0
      %p361 = por %p359, %p360
      %p362 = scmp.le.s32.totalorder 1, %s20
      %p363 = scmp.lt.s32.totalorder %s20, 3
      %p364 = pnand %p362, %p363
      %p365 = pneg %p364
      // Predicated region
      $region9: #{tpu_custom_call.1} parent=5 // pred_check
        _
      $region10: #{tpu_custom_call.1} parent=5 // pred_check_branch
        %367 = sbr.rel (%p364) target = $region12
      $region11: #{tpu_custom_call.1} parent=5 // pred_region
        %s368 = ssub.s32 %s20, 1
        // Predicated region
        $region13: #{tpu_custom_call.1} parent=11 // pred_check
          %p369 = pneg %p53
        $region14: #{tpu_custom_call.1} parent=11 // pred_check_branch
          %371 = sbr.rel (%p369) target = $region16
        $region15: #{tpu_custom_call.1} parent=11 // pred_region
          _
        $region16: #{tpu_custom_call.1} parent=11 // pred_fallthru
          _
        // Predicated region
        $region17: #{tpu_custom_call.1} parent=11 // pred_check
          %p372 = pneg %p74
        $region18: #{tpu_custom_call.1} parent=11 // pred_check_branch
          %374 = sbr.rel (%p372) target = $region20
        $region19: #{tpu_custom_call.1} parent=11 // pred_region
          _
        $region20: #{tpu_custom_call.1} parent=11 // pred_fallthru
          _
      $region12: #{tpu_custom_call.1} parent=5 // pred_fallthru
        _
      %p375 = scmp.lt.s32.totalorder %s20, 2
      // Predicated region
      $region21: #{tpu_custom_call.1} parent=5 // pred_check
        %p376 = pneg %p375
      $region22: #{tpu_custom_call.1} parent=5 // pred_check_branch
        %378 = sbr.rel (%p376) target = $region24
      $region23: #{tpu_custom_call.1} parent=5 // pred_region
        // Predicated region
        $region25: #{tpu_custom_call.1} parent=23 // pred_check
          %p379 = pneg %p96
        $region26: #{tpu_custom_call.1} parent=23 // pred_check_branch
          %381 = sbr.rel (%p379) target = $region28
        $region27: #{tpu_custom_call.1} parent=23 // pred_region
          %p382 = scmp.lt.s32.totalorder %s27, 1
          %s383 = scalar_select %p382, %s27, 1
          %p384 = scmp.lt.s32.totalorder %s28, 0
          %s385 = scalar_select %p384, %s28, 0
          %s386 = sadd.s32 %s385, %s383
          %s387 = smul.addr %s386, 4
          %s388 = scalar_lea.vmem %s2, %s387
        $region28: #{tpu_custom_call.1} parent=23 // pred_fallthru
          _
        // Predicated region
        $region29: #{tpu_custom_call.1} parent=23 // pred_check
          %p389 = pneg %p124
        $region30: #{tpu_custom_call.1} parent=23 // pred_check_branch
          %391 = sbr.rel (%p389) target = $region32
        $region31: #{tpu_custom_call.1} parent=23 // pred_region
          %p392 = scmp.lt.s32.totalorder %s27, 1
          %s393 = scalar_select %p392, %s27, 1
          %p394 = scmp.lt.s32.totalorder %s28, 0
          %s395 = scalar_select %p394, %s28, 0
          %s396 = sadd.s32 %s395, %s393
          %s397 = smul.addr %s396, 4
          %s398 = scalar_lea.vmem %s3, %s397
        $region32: #{tpu_custom_call.1} parent=23 // pred_fallthru
          _
        // Predicated region
        $region33: #{tpu_custom_call.1} parent=23 // pred_check
          %p399 = pneg %p152
        $region34: #{tpu_custom_call.1} parent=23 // pred_check_branch
          %401 = sbr.rel (%p399) target = $region36
        $region35: #{tpu_custom_call.1} parent=23 // pred_region
          %p402 = scmp.lt.s32.totalorder %s27, 1
          %s403 = scalar_select %p402, %s27, 1
          %p404 = scmp.lt.s32.totalorder %s28, 0
          %s405 = scalar_select %p404, %s28, 0
          %s406 = sadd.s32 %s405, %s403
          %s407 = smul.addr %s406, 4
          %s408 = scalar_lea.vmem %s4, %s407
        $region36: #{tpu_custom_call.1} parent=23 // pred_fallthru
          _
        // Predicated region
        $region37: #{tpu_custom_call.1} parent=23 // pred_check
          %p409 = pneg %p180
        $region38: #{tpu_custom_call.1} parent=23 // pred_check_branch
          %411 = sbr.rel (%p409) target = $region40
        $region39: #{tpu_custom_call.1} parent=23 // pred_region
          %p412 = scmp.lt.s32.totalorder %s27, 1
          %s413 = scalar_select %p412, %s27, 1
          %p414 = scmp.lt.s32.totalorder %s28, 0
          %s415 = scalar_select %p414, %s28, 0
          %s416 = sadd.s32 %s415, %s413
          %s417 = smul.addr %s416, 4
          %s418 = scalar_lea.vmem %s5, %s417
        $region40: #{tpu_custom_call.1} parent=23 // pred_fallthru
          _
        // Predicated region
        $region41: #{tpu_custom_call.1} parent=23 // pred_check
          %p419 = pneg %p208
        $region42: #{tpu_custom_call.1} parent=23 // pred_check_branch
          %421 = sbr.rel (%p419) target = $region44
        $region43: #{tpu_custom_call.1} parent=23 // pred_region
          %p422 = scmp.lt.s32.totalorder %s27, 1
          %s423 = scalar_select %p422, %s27, 1
          %p424 = scmp.lt.s32.totalorder %s28, 0
          %s425 = scalar_select %p424, %s28, 0
          %s426 = sadd.s32 %s425, %s423
          %s427 = smul.addr %s426, 4
          %s428 = scalar_lea.vmem %s6, %s427
        $region44: #{tpu_custom_call.1} parent=23 // pred_fallthru
          _
        // Predicated region
        $region45: #{tpu_custom_call.1} parent=23 // pred_check
          %p429 = pneg %p236
        $region46: #{tpu_custom_call.1} parent=23 // pred_check_branch
          %431 = sbr.rel (%p429) target = $region48
        $region47: #{tpu_custom_call.1} parent=23 // pred_region
          %p432 = scmp.lt.s32.totalorder %s27, 1
          %s433 = scalar_select %p432, %s27, 1
          %p434 = scmp.lt.s32.totalorder %s28, 0
          %s435 = scalar_select %p434, %s28, 0
          %s436 = sadd.s32 %s435, %s433
          %s437 = smul.addr %s436, 4
          %s438 = scalar_lea.vmem %s7, %s437
        $region48: #{tpu_custom_call.1} parent=23 // pred_fallthru
          _
        // Predicated region
        $region49: #{tpu_custom_call.1} parent=23 // pred_check
          %p439 = pneg %p264
        $region50: #{tpu_custom_call.1} parent=23 // pred_check_branch
          %441 = sbr.rel (%p439) target = $region52
        $region51: #{tpu_custom_call.1} parent=23 // pred_region
          %p442 = scmp.lt.s32.totalorder %s27, 1
          %s443 = scalar_select %p442, %s27, 1
          %p444 = scmp.lt.s32.totalorder %s28, 0
          %s445 = scalar_select %p444, %s28, 0
          %s446 = sadd.s32 %s445, %s443
          %s447 = smul.addr %s446, 4
          %s448 = scalar_lea.vmem %s8, %s447
        $region52: #{tpu_custom_call.1} parent=23 // pred_fallthru
          _
        // Predicated region
        $region53: #{tpu_custom_call.1} parent=23 // pred_check
          %p449 = pneg %p292
        $region54: #{tpu_custom_call.1} parent=23 // pred_check_branch
          %451 = sbr.rel (%p449) target = $region56
        $region55: #{tpu_custom_call.1} parent=23 // pred_region
          %p452 = scmp.lt.s32.totalorder %s27, 1
          %s453 = scalar_select %p452, %s27, 1
          %p454 = scmp.lt.s32.totalorder %s28, 0
          %s455 = scalar_select %p454, %s28, 0
          %s456 = sadd.s32 %s455, %s453
          %s457 = smul.addr %s456, 4
          %s458 = scalar_lea.vmem %s9, %s457
        $region56: #{tpu_custom_call.1} parent=23 // pred_fallthru
          _
        // Predicated region
        $region57: #{tpu_custom_call.1} parent=23 // pred_check
          %p459 = pneg %p320
        $region58: #{tpu_custom_call.1} parent=23 // pred_check_branch
          %461 = sbr.rel (%p459) target = $region60
        $region59: #{tpu_custom_call.1} parent=23 // pred_region
          %p462 = scmp.lt.s32.totalorder %s27, 1
          %s463 = scalar_select %p462, %s27, 1
          %p464 = scmp.lt.s32.totalorder %s28, 0
          %s465 = scalar_select %p464, %s28, 0
          %s466 = sadd.s32 %s465, %s463
          %s467 = smul.addr %s466, 4
          %s468 = scalar_lea.vmem %s10, %s467
        $region60: #{tpu_custom_call.1} parent=23 // pred_fallthru
          _
      $region24: #{tpu_custom_call.1} parent=5 // pred_fallthru
        _
      %p469 = scmp.le.s32.totalorder 1, %s20
      %p470 = scmp.lt.s32.totalorder %s20, 3
      %p471 = pnand %p469, %p470
      %p472 = pneg %p471
      // Predicated region
      $region61: #{tpu_custom_call.1} parent=5 // pred_check
        _
      $region62: #{tpu_custom_call.1} parent=5 // pred_check_branch
        %474 = sbr.rel (%p471) target = $region64
      $region63: #{tpu_custom_call.1} parent=5 // pred_region
        %s475 = ssub.s32 %s20, 1
        %p476 = pneg %p53
        %p477 = pneg %p50
        %p478 = pneg %p74
        %p479 = pneg %p71
        %p480 = scmp.lt.s32.totalorder %s29, 1
        %s481 = scalar_select %p480, %s29, 1
        %p482 = scmp.lt.s32.totalorder %s30, 0
        %s483 = scalar_select %p482, %s30, 0
        %s484 = sadd.s32 %s483, %s481
        %s485 = smul.addr %s484, 4
        %s486 = scalar_lea.vmem %s2, %s485
        %p487 = pneg %p102
        %p488 = pneg %p99
        %p489 = scmp.lt.s32.totalorder %s29, 1
        %s490 = scalar_select %p489, %s29, 1
        %p491 = scmp.lt.s32.totalorder %s30, 0
        %s492 = scalar_select %p491, %s30, 0
        %s493 = sadd.s32 %s492, %s490
        %s494 = smul.addr %s493, 4
        %s495 = scalar_lea.vmem %s3, %s494
        %p496 = pneg %p130
        %p497 = pneg %p127
        %p498 = scmp.lt.s32.totalorder %s29, 1
        %s499 = scalar_select %p498, %s29, 1
        %p500 = scmp.lt.s32.totalorder %s30, 0
        %s501 = scalar_select %p500, %s30, 0
        %s502 = sadd.s32 %s501, %s499
        %s503 = smul.addr %s502, 4
        %s504 = scalar_lea.vmem %s4, %s503
        %p505 = pneg %p158
        %p506 = pneg %p155
        %p507 = scmp.lt.s32.totalorder %s29, 1
        %s508 = scalar_select %p507, %s29, 1
        %p509 = scmp.lt.s32.totalorder %s30, 0
        %s510 = scalar_select %p509, %s30, 0
        %s511 = sadd.s32 %s510, %s508
        %s512 = smul.addr %s511, 4
        %s513 = scalar_lea.vmem %s5, %s512
        %p514 = pneg %p186
        %p515 = pneg %p183
        %p516 = scmp.lt.s32.totalorder %s29, 1
        %s517 = scalar_select %p516, %s29, 1
        %p518 = scmp.lt.s32.totalorder %s30, 0
        %s519 = scalar_select %p518, %s30, 0
        %s520 = sadd.s32 %s519, %s517
        %s521 = smul.addr %s520, 4
        %s522 = scalar_lea.vmem %s6, %s521
        %p523 = pneg %p214
        %p524 = pneg %p211
        %p525 = scmp.lt.s32.totalorder %s29, 1
        %s526 = scalar_select %p525, %s29, 1
        %p527 = scmp.lt.s32.totalorder %s30, 0
        %s528 = scalar_select %p527, %s30, 0
        %s529 = sadd.s32 %s528, %s526
        %s530 = smul.addr %s529, 4
        %s531 = scalar_lea.vmem %s7, %s530
        %p532 = pneg %p242
        %p533 = pneg %p239
        %p534 = scmp.lt.s32.totalorder %s29, 1
        %s535 = scalar_select %p534, %s29, 1
        %p536 = scmp.lt.s32.totalorder %s30, 0
        %s537 = scalar_select %p536, %s30, 0
        %s538 = sadd.s32 %s537, %s535
        %s539 = smul.addr %s538, 4
        %s540 = scalar_lea.vmem %s8, %s539
        %p541 = pneg %p270
        %p542 = pneg %p267
        %p543 = scmp.lt.s32.totalorder %s29, 1
        %s544 = scalar_select %p543, %s29, 1
        %p545 = scmp.lt.s32.totalorder %s30, 0
        %s546 = scalar_select %p545, %s30, 0
        %s547 = sadd.s32 %s546, %s544
        %s548 = smul.addr %s547, 4
        %s549 = scalar_lea.vmem %s9, %s548
        %p550 = pneg %p298
        %p551 = pneg %p295
        %p552 = scmp.lt.s32.totalorder %s29, 1
        %s553 = scalar_select %p552, %s29, 1
        %p554 = scmp.lt.s32.totalorder %s30, 0
        %s555 = scalar_select %p554, %s30, 0
        %s556 = sadd.s32 %s555, %s553
        %s557 = smul.addr %s556, 4
        %s558 = scalar_lea.vmem %s10, %s557
        %p559 = pneg %p326
        %p560 = pneg %p323
        %p561 = pneg %p354
        %p562 = pneg %p351
        %s563 = sand.u32 %s341, 1
        %s564 = scalar_lea.sflag [#allocation3], %s563
        %s565 = sand.u32 %s341, 1
        %s566 = smul.addr %s565, 4
        %s567 = scalar_lea.vmem [#allocation2], %s566
        %p568 = scmp.lt.s32.totalorder %s29, 1
        %s569 = scalar_select %p568, %s29, 1
        %p570 = scmp.lt.s32.totalorder %s30, 0
        %s571 = scalar_select %p570, %s30, 0
        %s572 = sadd.s32 %s571, %s569
        %s573 = smul.addr %s572, 4
        %s574 = scalar_lea.vmem %s2, %s573
        %p575 = scmp.lt.s32.totalorder %s29, 1
        %s576 = scalar_select %p575, %s29, 1
        %p577 = scmp.lt.s32.totalorder %s30, 0
        %s578 = scalar_select %p577, %s30, 0
        %s579 = sadd.s32 %s578, %s576
        %s580 = smul.addr %s579, 4
        %s581 = scalar_lea.vmem %s3, %s580
        %p582 = scmp.lt.s32.totalorder %s29, 1
        %s583 = scalar_select %p582, %s29, 1
        %p584 = scmp.lt.s32.totalorder %s30, 0
        %s585 = scalar_select %p584, %s30, 0
        %s586 = sadd.s32 %s585, %s583
        %s587 = smul.addr %s586, 4
        %s588 = scalar_lea.vmem %s4, %s587
        %p589 = scmp.lt.s32.totalorder %s29, 1
        %s590 = scalar_select %p589, %s29, 1
        %p591 = scmp.lt.s32.totalorder %s30, 0
        %s592 = scalar_select %p591, %s30, 0
        %s593 = sadd.s32 %s592, %s590
        %s594 = smul.addr %s593, 4
        %s595 = scalar_lea.vmem %s5, %s594
        %p596 = scmp.lt.s32.totalorder %s29, 1
        %s597 = scalar_select %p596, %s29, 1
        %p598 = scmp.lt.s32.totalorder %s30, 0
        %s599 = scalar_select %p598, %s30, 0
        %s600 = sadd.s32 %s599, %s597
        %s601 = smul.addr %s600, 4
        %s602 = scalar_lea.vmem %s6, %s601
        %p603 = scmp.lt.s32.totalorder %s29, 1
        %s604 = scalar_select %p603, %s29, 1
        %p605 = scmp.lt.s32.totalorder %s30, 0
        %s606 = scalar_select %p605, %s30, 0
        %s607 = sadd.s32 %s606, %s604
        %s608 = smul.addr %s607, 4
        %s609 = scalar_lea.vmem %s7, %s608
        %p610 = scmp.lt.s32.totalorder %s29, 1
        %s611 = scalar_select %p610, %s29, 1
        %p612 = scmp.lt.s32.totalorder %s30, 0
        %s613 = scalar_select %p612, %s30, 0
        %s614 = sadd.s32 %s613, %s611
        %s615 = smul.addr %s614, 4
        %s616 = scalar_lea.vmem %s8, %s615
        %p617 = scmp.lt.s32.totalorder %s29, 1
        %s618 = scalar_select %p617, %s29, 1
        %p619 = scmp.lt.s32.totalorder %s30, 0
        %s620 = scalar_select %p619, %s30, 0
        %s621 = sadd.s32 %s620, %s618
        %s622 = smul.addr %s621, 4
        %s623 = scalar_lea.vmem %s9, %s622
        %p624 = scmp.lt.s32.totalorder %s29, 1
        %s625 = scalar_select %p624, %s29, 1
        %p626 = scmp.lt.s32.totalorder %s30, 0
        %s627 = scalar_select %p626, %s30, 0
        %s628 = sadd.s32 %s627, %s625
        %s629 = smul.addr %s628, 4
        %s630 = scalar_lea.vmem %s10, %s629
        %v631 = vld [vmem:[%s0] sm:$0xf]
        %v632 = vld [vmem:[%s574] sm:$0xf]
        %s633 = scalar_lea.vmem %s0, 4
        %v634 = vld [vmem:[%s633] sm:$0xf]
        %v635 = vld [vmem:[%s581] sm:$0xf]
        %vm636 = vcmask 31744
        %v638 = vsel %vm636, %v634, 0
        %vm640 = vcmask 1043456
        %v642 = vsel %vm640, %v635, 0
        %644 = vmatprep.subr.mxu0 0.0
        %645 = vmatpush1.msra.mxu0 %v642
        %646 = vmatprep.subr.mxu0 0.0
        %647 = vmatpush1.msra.mxu0 0.0
        %648 = vmatprep.subr.mxu0 0.0
        %649 = vmatpush1.msra.mxu0 0.0
        %650 = vmatprep.subr.mxu0 0.0
        %651 = vmatpush1.msra.mxu0 0.0
        %652 = vmatprep.subr.mxu0 0.0
        %653 = vmatpush1.msra.mxu0 0.0
        %654 = vmatprep.subr.mxu0 0.0
        %655 = vmatpush1.msra.mxu0 0.0
        %656 = vmatprep.subr.mxu0 0.0
        %657 = vmatpush1.msra.mxu0 0.0
        %658 = vmatprep.subr.mxu0 0.0
        %659 = vmatpush1.msra.mxu0 0.0
        %660 = vmatprep.subr.mxu0 0.0
        %661 = vmatpush1.msra.mxu0 0.0
        %662 = vmatprep.subr.mxu0 0.0
        %663 = vmatpush1.msra.mxu0 0.0
        %664 = vmatprep.subr.mxu0 0.0
        %665 = vmatpush1.msra.mxu0 0.0
        %666 = vmatprep.subr.mxu0 0.0
        %667 = vmatpush1.msra.mxu0 0.0
        %668 = vmatprep.subr.mxu0 0.0
        %669 = vmatpush1.msra.mxu0 0.0
        %670 = vmatprep.subr.mxu0 0.0
        %671 = vmatpush1.msra.mxu0 0.0
        %672 = vmatprep.subr.mxu0 0.0
        %673 = vmatpush1.msra.mxu0 0.0
        %674 = vmatprep.subr.mxu0 0.0
        %675 = vmatpush1.msra.mxu0 0.0
        %676 = vmatprep.subr.mxu0 0.0
        %677 = vmatpush1.msra.mxu0 0.0
        %678 = vmatprep.subr.mxu0 0.0
        %679 = vmatpush1.msra.mxu0 0.0
        %680 = vmatprep.subr.mxu0 0.0
        %681 = vmatpush1.msra.mxu0 0.0
        %682 = vmatprep.subr.mxu0 0.0
        %683 = vmatpush1.msra.mxu0 0.0
        %684 = vmatprep.subr.mxu0 0.0
        %685 = vmatpush1.msra.mxu0 0.0
        %686 = vmatprep.subr.mxu0 0.0
        %687 = vmatpush1.msra.mxu0 0.0
        %688 = vmatprep.subr.mxu0 0.0
        %689 = vmatpush1.msra.mxu0 0.0
        %690 = vmatprep.subr.mxu0 0.0
        %691 = vmatpush1.msra.mxu0 0.0
        %692 = vmatprep.subr.mxu0 0.0
        %693 = vmatpush1.msra.mxu0 0.0
        %694 = vmatprep.subr.mxu0 0.0
        %695 = vmatpush1.msra.mxu0 0.0
        %696 = vmatprep.subr.mxu0 0.0
        %697 = vmatpush1.msra.mxu0 0.0
        %698 = vmatprep.subr.mxu0 0.0
        %699 = vmatpush1.msra.mxu0 0.0
        %700 = vmatprep.subr.mxu0 0.0
        %701 = vmatpush1.msra.mxu0 0.0
        %702 = vmatprep.subr.mxu0 0.0
        %703 = vmatpush1.msra.mxu0 0.0
        %704 = vmatprep.subr.mxu0 0.0
        %705 = vmatpush1.msra.mxu0 0.0
        %706 = vmatprep.subr.mxu0 0.0
        %707 = vmatpush1.msra.mxu0 0.0
        %708 = vmatprep.mubr.f32.mxu0 0.0
        %709 = vmatmul.mubr.f32.gmra.mrb[0].mxu0 %v638
        %v710 = vpop.f32.mrb[0].mxu0
        %v711 = vadd.f32 0.0, %v710
        %v712 = vpop.f32.mrb[0].mxu0
        %713 = vdwg.mxu0
        %v715 = vsel %vm636, %v631, 0
        %v718 = vsel %vm640, %v632, 0
        %720 = vmatprep.subr.mxu0 0.0
        %721 = vmatpush1.msra.mxu0 %v718
        %722 = vmatprep.subr.mxu0 0.0
        %723 = vmatpush1.msra.mxu0 0.0
        %724 = vmatprep.subr.mxu0 0.0
        %725 = vmatpush1.msra.mxu0 0.0
        %726 = vmatprep.subr.mxu0 0.0
        %727 = vmatpush1.msra.mxu0 0.0
        %728 = vmatprep.subr.mxu0 0.0
        %729 = vmatpush1.msra.mxu0 0.0
        %730 = vmatprep.subr.mxu0 0.0
        %731 = vmatpush1.msra.mxu0 0.0
        %732 = vmatprep.subr.mxu0 0.0
        %733 = vmatpush1.msra.mxu0 0.0
        %734 = vmatprep.subr.mxu0 0.0
        %735 = vmatpush1.msra.mxu0 0.0
        %736 = vmatprep.subr.mxu0 0.0
        %737 = vmatpush1.msra.mxu0 0.0
        %738 = vmatprep.subr.mxu0 0.0
        %739 = vmatpush1.msra.mxu0 0.0
        %740 = vmatprep.subr.mxu0 0.0
        %741 = vmatpush1.msra.mxu0 0.0
        %742 = vmatprep.subr.mxu0 0.0
        %743 = vmatpush1.msra.mxu0 0.0
        %744 = vmatprep.subr.mxu0 0.0
        %745 = vmatpush1.msra.mxu0 0.0
        %746 = vmatprep.subr.mxu0 0.0
        %747 = vmatpush1.msra.mxu0 0.0
        %748 = vmatprep.subr.mxu0 0.0
        %749 = vmatpush1.msra.mxu0 0.0
        %750 = vmatprep.subr.mxu0 0.0
        %751 = vmatpush1.msra.mxu0 0.0
        %752 = vmatprep.subr.mxu0 0.0
        %753 = vmatpush1.msra.mxu0 0.0
        %754 = vmatprep.subr.mxu0 0.0
        %755 = vmatpush1.msra.mxu0 0.0
        %756 = vmatprep.subr.mxu0 0.0
        %757 = vmatpush1.msra.mxu0 0.0
        %758 = vmatprep.subr.mxu0 0.0
        %759 = vmatpush1.msra.mxu0 0.0
        %760 = vmatprep.subr.mxu0 0.0
        %761 = vmatpush1.msra.mxu0 0.0
        %762 = vmatprep.subr.mxu0 0.0
        %763 = vmatpush1.msra.mxu0 0.0
        %764 = vmatprep.subr.mxu0 0.0
        %765 = vmatpush1.msra.mxu0 0.0
        %766 = vmatprep.subr.mxu0 0.0
        %767 = vmatpush1.msra.mxu0 0.0
        %768 = vmatprep.subr.mxu0 0.0
        %769 = vmatpush1.msra.mxu0 0.0
        %770 = vmatprep.subr.mxu0 0.0
        %771 = vmatpush1.msra.mxu0 0.0
        %772 = vmatprep.subr.mxu0 0.0
        %773 = vmatpush1.msra.mxu0 0.0
        %774 = vmatprep.subr.mxu0 0.0
        %775 = vmatpush1.msra.mxu0 0.0
        %776 = vmatprep.subr.mxu0 0.0
        %777 = vmatpush1.msra.mxu0 0.0
        %778 = vmatprep.subr.mxu0 0.0
        %779 = vmatpush1.msra.mxu0 0.0
        %780 = vmatprep.subr.mxu0 0.0
        %781 = vmatpush1.msra.mxu0 0.0
        %782 = vmatprep.subr.mxu0 0.0
        %783 = vmatpush1.msra.mxu0 0.0
        %784 = vmatprep.mubr.f32.mxu0 0.0
        %785 = vmatmul.mubr.f32.gmra.mrb[0].mxu0 %v715
        %v786 = vpop.f32.mrb[0].mxu0
        %v787 = vadd.f32 %v711, %v786
        %v788 = vpop.f32.mrb[0].mxu0
        %789 = vdwg.mxu0
        %s790 = scalar_lea.vmem %s0, 8
        %v791 = vld [vmem:[%s790] sm:$0xf]
        %v792 = vld [vmem:[%s588] sm:$0xf]
        %v794 = vsel %vm636, %v791, 0
        %v797 = vsel %vm640, %v792, 0
        %799 = vmatprep.subr.mxu0 0.0
        %800 = vmatpush1.msra.mxu0 %v797
        %801 = vmatprep.subr.mxu0 0.0
        %802 = vmatpush1.msra.mxu0 0.0
        %803 = vmatprep.subr.mxu0 0.0
        %804 = vmatpush1.msra.mxu0 0.0
        %805 = vmatprep.subr.mxu0 0.0
        %806 = vmatpush1.msra.mxu0 0.0
        %807 = vmatprep.subr.mxu0 0.0
        %808 = vmatpush1.msra.mxu0 0.0
        %809 = vmatprep.subr.mxu0 0.0
        %810 = vmatpush1.msra.mxu0 0.0
        %811 = vmatprep.subr.mxu0 0.0
        %812 = vmatpush1.msra.mxu0 0.0
        %813 = vmatprep.subr.mxu0 0.0
        %814 = vmatpush1.msra.mxu0 0.0
        %815 = vmatprep.subr.mxu0 0.0
        %816 = vmatpush1.msra.mxu0 0.0
        %817 = vmatprep.subr.mxu0 0.0
        %818 = vmatpush1.msra.mxu0 0.0
        %819 = vmatprep.subr.mxu0 0.0
        %820 = vmatpush1.msra.mxu0 0.0
        %821 = vmatprep.subr.mxu0 0.0
        %822 = vmatpush1.msra.mxu0 0.0
        %823 = vmatprep.subr.mxu0 0.0
        %824 = vmatpush1.msra.mxu0 0.0
        %825 = vmatprep.subr.mxu0 0.0
        %826 = vmatpush1.msra.mxu0 0.0
        %827 = vmatprep.subr.mxu0 0.0
        %828 = vmatpush1.msra.mxu0 0.0
        %829 = vmatprep.subr.mxu0 0.0
        %830 = vmatpush1.msra.mxu0 0.0
        %831 = vmatprep.subr.mxu0 0.0
        %832 = vmatpush1.msra.mxu0 0.0
        %833 = vmatprep.subr.mxu0 0.0
        %834 = vmatpush1.msra.mxu0 0.0
        %835 = vmatprep.subr.mxu0 0.0
        %836 = vmatpush1.msra.mxu0 0.0
        %837 = vmatprep.subr.mxu0 0.0
        %838 = vmatpush1.msra.mxu0 0.0
        %839 = vmatprep.subr.mxu0 0.0
        %840 = vmatpush1.msra.mxu0 0.0
        %841 = vmatprep.subr.mxu0 0.0
        %842 = vmatpush1.msra.mxu0 0.0
        %843 = vmatprep.subr.mxu0 0.0
        %844 = vmatpush1.msra.mxu0 0.0
        %845 = vmatprep.subr.mxu0 0.0
        %846 = vmatpush1.msra.mxu0 0.0
        %847 = vmatprep.subr.mxu0 0.0
        %848 = vmatpush1.msra.mxu0 0.0
        %849 = vmatprep.subr.mxu0 0.0
        %850 = vmatpush1.msra.mxu0 0.0
        %851 = vmatprep.subr.mxu0 0.0
        %852 = vmatpush1.msra.mxu0 0.0
        %853 = vmatprep.subr.mxu0 0.0
        %854 = vmatpush1.msra.mxu0 0.0
        %855 = vmatprep.subr.mxu0 0.0
        %856 = vmatpush1.msra.mxu0 0.0
        %857 = vmatprep.subr.mxu0 0.0
        %858 = vmatpush1.msra.mxu0 0.0
        %859 = vmatprep.subr.mxu0 0.0
        %860 = vmatpush1.msra.mxu0 0.0
        %861 = vmatprep.subr.mxu0 0.0
        %862 = vmatpush1.msra.mxu0 0.0
        %863 = vmatprep.mubr.f32.mxu0 0.0
        %864 = vmatmul.mubr.f32.gmra.mrb[0].mxu0 %v794
        %v865 = vpop.f32.mrb[0].mxu0
        %v866 = vadd.f32 0.0, %v865
        %v867 = vpop.f32.mrb[0].mxu0
        %868 = vdwg.mxu0
        %v869 = vadd.f32 %v787, %v866
        %s870 = scalar_lea.vmem %s0, 12
        %v871 = vld [vmem:[%s870] sm:$0xf]
        %v872 = vld [vmem:[%s595] sm:$0xf]
        %v874 = vsel %vm636, %v871, 0
        %v877 = vsel %vm640, %v872, 0
        %879 = vmatprep.subr.mxu0 0.0
        %880 = vmatpush1.msra.mxu0 %v877
        %881 = vmatprep.subr.mxu0 0.0
        %882 = vmatpush1.msra.mxu0 0.0
        %883 = vmatprep.subr.mxu0 0.0
        %884 = vmatpush1.msra.mxu0 0.0
        %885 = vmatprep.subr.mxu0 0.0
        %886 = vmatpush1.msra.mxu0 0.0
        %887 = vmatprep.subr.mxu0 0.0
        %888 = vmatpush1.msra.mxu0 0.0
        %889 = vmatprep.subr.mxu0 0.0
        %890 = vmatpush1.msra.mxu0 0.0
        %891 = vmatprep.subr.mxu0 0.0
        %892 = vmatpush1.msra.mxu0 0.0
        %893 = vmatprep.subr.mxu0 0.0
        %894 = vmatpush1.msra.mxu0 0.0
        %895 = vmatprep.subr.mxu0 0.0
        %896 = vmatpush1.msra.mxu0 0.0
        %897 = vmatprep.subr.mxu0 0.0
        %898 = vmatpush1.msra.mxu0 0.0
        %899 = vmatprep.subr.mxu0 0.0
        %900 = vmatpush1.msra.mxu0 0.0
        %901 = vmatprep.subr.mxu0 0.0
        %902 = vmatpush1.msra.mxu0 0.0
        %903 = vmatprep.subr.mxu0 0.0
        %904 = vmatpush1.msra.mxu0 0.0
        %905 = vmatprep.subr.mxu0 0.0
        %906 = vmatpush1.msra.mxu0 0.0
        %907 = vmatprep.subr.mxu0 0.0
        %908 = vmatpush1.msra.mxu0 0.0
        %909 = vmatprep.subr.mxu0 0.0
        %910 = vmatpush1.msra.mxu0 0.0
        %911 = vmatprep.subr.mxu0 0.0
        %912 = vmatpush1.msra.mxu0 0.0
        %913 = vmatprep.subr.mxu0 0.0
        %914 = vmatpush1.msra.mxu0 0.0
        %915 = vmatprep.subr.mxu0 0.0
        %916 = vmatpush1.msra.mxu0 0.0
        %917 = vmatprep.subr.mxu0 0.0
        %918 = vmatpush1.msra.mxu0 0.0
        %919 = vmatprep.subr.mxu0 0.0
        %920 = vmatpush1.msra.mxu0 0.0
        %921 = vmatprep.subr.mxu0 0.0
        %922 = vmatpush1.msra.mxu0 0.0
        %923 = vmatprep.subr.mxu0 0.0
        %924 = vmatpush1.msra.mxu0 0.0
        %925 = vmatprep.subr.mxu0 0.0
        %926 = vmatpush1.msra.mxu0 0.0
        %927 = vmatprep.subr.mxu0 0.0
        %928 = vmatpush1.msra.mxu0 0.0
        %929 = vmatprep.subr.mxu0 0.0
        %930 = vmatpush1.msra.mxu0 0.0
        %931 = vmatprep.subr.mxu0 0.0
        %932 = vmatpush1.msra.mxu0 0.0
        %933 = vmatprep.subr.mxu0 0.0
        %934 = vmatpush1.msra.mxu0 0.0
        %935 = vmatprep.subr.mxu0 0.0
        %936 = vmatpush1.msra.mxu0 0.0
        %937 = vmatprep.subr.mxu0 0.0
        %938 = vmatpush1.msra.mxu0 0.0
        %939 = vmatprep.subr.mxu0 0.0
        %940 = vmatpush1.msra.mxu0 0.0
        %941 = vmatprep.subr.mxu0 0.0
        %942 = vmatpush1.msra.mxu0 0.0
        %943 = vmatprep.mubr.f32.mxu0 0.0
        %944 = vmatmul.mubr.f32.gmra.mrb[0].mxu0 %v874
        %v945 = vpop.f32.mrb[0].mxu0
        %v946 = vadd.f32 0.0, %v945
        %v947 = vpop.f32.mrb[0].mxu0
        %948 = vdwg.mxu0
        %v949 = vadd.f32 %v869, %v946
        %s950 = scalar_lea.vmem %s0, 16
        %v951 = vld [vmem:[%s950] sm:$0xf]
        %v952 = vld [vmem:[%s602] sm:$0xf]
        %v954 = vsel %vm636, %v951, 0
        %v957 = vsel %vm640, %v952, 0
        %959 = vmatprep.subr.mxu0 0.0
        %960 = vmatpush1.msra.mxu0 %v957
        %961 = vmatprep.subr.mxu0 0.0
        %962 = vmatpush1.msra.mxu0 0.0
        %963 = vmatprep.subr.mxu0 0.0
        %964 = vmatpush1.msra.mxu0 0.0
        %965 = vmatprep.subr.mxu0 0.0
        %966 = vmatpush1.msra.mxu0 0.0
        %967 = vmatprep.subr.mxu0 0.0
        %968 = vmatpush1.msra.mxu0 0.0
        %969 = vmatprep.subr.mxu0 0.0
        %970 = vmatpush1.msra.mxu0 0.0
        %971 = vmatprep.subr.mxu0 0.0
        %972 = vmatpush1.msra.mxu0 0.0
        %973 = vmatprep.subr.mxu0 0.0
        %974 = vmatpush1.msra.mxu0 0.0
        %975 = vmatprep.subr.mxu0 0.0
        %976 = vmatpush1.msra.mxu0 0.0
        %977 = vmatprep.subr.mxu0 0.0
        %978 = vmatpush1.msra.mxu0 0.0
        %979 = vmatprep.subr.mxu0 0.0
        %980 = vmatpush1.msra.mxu0 0.0
        %981 = vmatprep.subr.mxu0 0.0
        %982 = vmatpush1.msra.mxu0 0.0
        %983 = vmatprep.subr.mxu0 0.0
        %984 = vmatpush1.msra.mxu0 0.0
        %985 = vmatprep.subr.mxu0 0.0
        %986 = vmatpush1.msra.mxu0 0.0
        %987 = vmatprep.subr.mxu0 0.0
        %988 = vmatpush1.msra.mxu0 0.0
        %989 = vmatprep.subr.mxu0 0.0
        %990 = vmatpush1.msra.mxu0 0.0
        %991 = vmatprep.subr.mxu0 0.0
        %992 = vmatpush1.msra.mxu0 0.0
        %993 = vmatprep.subr.mxu0 0.0
        %994 = vmatpush1.msra.mxu0 0.0
        %995 = vmatprep.subr.mxu0 0.0
        %996 = vmatpush1.msra.mxu0 0.0
        %997 = vmatprep.subr.mxu0 0.0
        %998 = vmatpush1.msra.mxu0 0.0
        %999 = vmatprep.subr.mxu0 0.0
        %1000 = vmatpush1.msra.mxu0 0.0
        %1001 = vmatprep.subr.mxu0 0.0
        %1002 = vmatpush1.msra.mxu0 0.0
        %1003 = vmatprep.subr.mxu0 0.0
        %1004 = vmatpush1.msra.mxu0 0.0
        %1005 = vmatprep.subr.mxu0 0.0
        %1006 = vmatpush1.msra.mxu0 0.0
        %1007 = vmatprep.subr.mxu0 0.0
        %1008 = vmatpush1.msra.mxu0 0.0
        %1009 = vmatprep.subr.mxu0 0.0
        %1010 = vmatpush1.msra.mxu0 0.0
        %1011 = vmatprep.subr.mxu0 0.0
        %1012 = vmatpush1.msra.mxu0 0.0
        %1013 = vmatprep.subr.mxu0 0.0
        %1014 = vmatpush1.msra.mxu0 0.0
        %1015 = vmatprep.subr.mxu0 0.0
        %1016 = vmatpush1.msra.mxu0 0.0
        %1017 = vmatprep.subr.mxu0 0.0
        %1018 = vmatpush1.msra.mxu0 0.0
        %1019 = vmatprep.subr.mxu0 0.0
        %1020 = vmatpush1.msra.mxu0 0.0
        %1021 = vmatprep.subr.mxu0 0.0
        %1022 = vmatpush1.msra.mxu0 0.0
        %1023 = vmatprep.mubr.f32.mxu0 0.0
        %1024 = vmatmul.mubr.f32.gmra.mrb[0].mxu0 %v954
        %v1025 = vpop.f32.mrb[0].mxu0
        %v1026 = vadd.f32 0.0, %v1025
        %v1027 = vpop.f32.mrb[0].mxu0
        %1028 = vdwg.mxu0
        %v1029 = vadd.f32 %v949, %v1026
        %s1030 = scalar_lea.vmem %s0, 20
        %v1031 = vld [vmem:[%s1030] sm:$0xf]
        %v1032 = vld [vmem:[%s609] sm:$0xf]
        %v1034 = vsel %vm636, %v1031, 0
        %v1037 = vsel %vm640, %v1032, 0
        %1039 = vmatprep.subr.mxu0 0.0
        %1040 = vmatpush1.msra.mxu0 %v1037
        %1041 = vmatprep.subr.mxu0 0.0
        %1042 = vmatpush1.msra.mxu0 0.0
        %1043 = vmatprep.subr.mxu0 0.0
        %1044 = vmatpush1.msra.mxu0 0.0
        %1045 = vmatprep.subr.mxu0 0.0
        %1046 = vmatpush1.msra.mxu0 0.0
        %1047 = vmatprep.subr.mxu0 0.0
        %1048 = vmatpush1.msra.mxu0 0.0
        %1049 = vmatprep.subr.mxu0 0.0
        %1050 = vmatpush1.msra.mxu0 0.0
        %1051 = vmatprep.subr.mxu0 0.0
        %1052 = vmatpush1.msra.mxu0 0.0
        %1053 = vmatprep.subr.mxu0 0.0
        %1054 = vmatpush1.msra.mxu0 0.0
        %1055 = vmatprep.subr.mxu0 0.0
        %1056 = vmatpush1.msra.mxu0 0.0
        %1057 = vmatprep.subr.mxu0 0.0
        %1058 = vmatpush1.msra.mxu0 0.0
        %1059 = vmatprep.subr.mxu0 0.0
        %1060 = vmatpush1.msra.mxu0 0.0
        %1061 = vmatprep.subr.mxu0 0.0
        %1062 = vmatpush1.msra.mxu0 0.0
        %1063 = vmatprep.subr.mxu0 0.0
        %1064 = vmatpush1.msra.mxu0 0.0
        %1065 = vmatprep.subr.mxu0 0.0
        %1066 = vmatpush1.msra.mxu0 0.0
        %1067 = vmatprep.subr.mxu0 0.0
        %1068 = vmatpush1.msra.mxu0 0.0
        %1069 = vmatprep.subr.mxu0 0.0
        %1070 = vmatpush1.msra.mxu0 0.0
        %1071 = vmatprep.subr.mxu0 0.0
        %1072 = vmatpush1.msra.mxu0 0.0
        %1073 = vmatprep.subr.mxu0 0.0
        %1074 = vmatpush1.msra.mxu0 0.0
        %1075 = vmatprep.subr.mxu0 0.0
        %1076 = vmatpush1.msra.mxu0 0.0
        %1077 = vmatprep.subr.mxu0 0.0
        %1078 = vmatpush1.msra.mxu0 0.0
        %1079 = vmatprep.subr.mxu0 0.0
        %1080 = vmatpush1.msra.mxu0 0.0
        %1081 = vmatprep.subr.mxu0 0.0
        %1082 = vmatpush1.msra.mxu0 0.0
        %1083 = vmatprep.subr.mxu0 0.0
        %1084 = vmatpush1.msra.mxu0 0.0
        %1085 = vmatprep.subr.mxu0 0.0
        %1086 = vmatpush1.msra.mxu0 0.0
        %1087 = vmatprep.subr.mxu0 0.0
        %1088 = vmatpush1.msra.mxu0 0.0
        %1089 = vmatprep.subr.mxu0 0.0
        %1090 = vmatpush1.msra.mxu0 0.0
        %1091 = vmatprep.subr.mxu0 0.0
        %1092 = vmatpush1.msra.mxu0 0.0
        %1093 = vmatprep.subr.mxu0 0.0
        %1094 = vmatpush1.msra.mxu0 0.0
        %1095 = vmatprep.subr.mxu0 0.0
        %1096 = vmatpush1.msra.mxu0 0.0
        %1097 = vmatprep.subr.mxu0 0.0
        %1098 = vmatpush1.msra.mxu0 0.0
        %1099 = vmatprep.subr.mxu0 0.0
        %1100 = vmatpush1.msra.mxu0 0.0
        %1101 = vmatprep.subr.mxu0 0.0
        %1102 = vmatpush1.msra.mxu0 0.0
        %1103 = vmatprep.mubr.f32.mxu0 0.0
        %1104 = vmatmul.mubr.f32.gmra.mrb[0].mxu0 %v1034
        %v1105 = vpop.f32.mrb[0].mxu0
        %v1106 = vadd.f32 0.0, %v1105
        %v1107 = vpop.f32.mrb[0].mxu0
        %1108 = vdwg.mxu0
        %v1109 = vadd.f32 %v1029, %v1106
        %s1110 = scalar_lea.vmem %s0, 24
        %v1111 = vld [vmem:[%s1110] sm:$0xf]
        %v1112 = vld [vmem:[%s616] sm:$0xf]
        %v1114 = vsel %vm636, %v1111, 0
        %v1117 = vsel %vm640, %v1112, 0
        %1119 = vmatprep.subr.mxu0 0.0
        %1120 = vmatpush1.msra.mxu0 %v1117
        %1121 = vmatprep.subr.mxu0 0.0
        %1122 = vmatpush1.msra.mxu0 0.0
        %1123 = vmatprep.subr.mxu0 0.0
        %1124 = vmatpush1.msra.mxu0 0.0
        %1125 = vmatprep.subr.mxu0 0.0
        %1126 = vmatpush1.msra.mxu0 0.0
        %1127 = vmatprep.subr.mxu0 0.0
        %1128 = vmatpush1.msra.mxu0 0.0
        %1129 = vmatprep.subr.mxu0 0.0
        %1130 = vmatpush1.msra.mxu0 0.0
        %1131 = vmatprep.subr.mxu0 0.0
        %1132 = vmatpush1.msra.mxu0 0.0
        %1133 = vmatprep.subr.mxu0 0.0
        %1134 = vmatpush1.msra.mxu0 0.0
        %1135 = vmatprep.subr.mxu0 0.0
        %1136 = vmatpush1.msra.mxu0 0.0
        %1137 = vmatprep.subr.mxu0 0.0
        %1138 = vmatpush1.msra.mxu0 0.0
        %1139 = vmatprep.subr.mxu0 0.0
        %1140 = vmatpush1.msra.mxu0 0.0
        %1141 = vmatprep.subr.mxu0 0.0
        %1142 = vmatpush1.msra.mxu0 0.0
        %1143 = vmatprep.subr.mxu0 0.0
        %1144 = vmatpush1.msra.mxu0 0.0
        %1145 = vmatprep.subr.mxu0 0.0
        %1146 = vmatpush1.msra.mxu0 0.0
        %1147 = vmatprep.subr.mxu0 0.0
        %1148 = vmatpush1.msra.mxu0 0.0
        %1149 = vmatprep.subr.mxu0 0.0
        %1150 = vmatpush1.msra.mxu0 0.0
        %1151 = vmatprep.subr.mxu0 0.0
        %1152 = vmatpush1.msra.mxu0 0.0
        %1153 = vmatprep.subr.mxu0 0.0
        %1154 = vmatpush1.msra.mxu0 0.0
        %1155 = vmatprep.subr.mxu0 0.0
        %1156 = vmatpush1.msra.mxu0 0.0
        %1157 = vmatprep.subr.mxu0 0.0
        %1158 = vmatpush1.msra.mxu0 0.0
        %1159 = vmatprep.subr.mxu0 0.0
        %1160 = vmatpush1.msra.mxu0 0.0
        %1161 = vmatprep.subr.mxu0 0.0
        %1162 = vmatpush1.msra.mxu0 0.0
        %1163 = vmatprep.subr.mxu0 0.0
        %1164 = vmatpush1.msra.mxu0 0.0
        %1165 = vmatprep.subr.mxu0 0.0
        %1166 = vmatpush1.msra.mxu0 0.0
        %1167 = vmatprep.subr.mxu0 0.0
        %1168 = vmatpush1.msra.mxu0 0.0
        %1169 = vmatprep.subr.mxu0 0.0
        %1170 = vmatpush1.msra.mxu0 0.0
        %1171 = vmatprep.subr.mxu0 0.0
        %1172 = vmatpush1.msra.mxu0 0.0
        %1173 = vmatprep.subr.mxu0 0.0
        %1174 = vmatpush1.msra.mxu0 0.0
        %1175 = vmatprep.subr.mxu0 0.0
        %1176 = vmatpush1.msra.mxu0 0.0
        %1177 = vmatprep.subr.mxu0 0.0
        %1178 = vmatpush1.msra.mxu0 0.0
        %1179 = vmatprep.subr.mxu0 0.0
        %1180 = vmatpush1.msra.mxu0 0.0
        %1181 = vmatprep.subr.mxu0 0.0
        %1182 = vmatpush1.msra.mxu0 0.0
        %1183 = vmatprep.mubr.f32.mxu0 0.0
        %1184 = vmatmul.mubr.f32.gmra.mrb[0].mxu0 %v1114
        %v1185 = vpop.f32.mrb[0].mxu0
        %v1186 = vadd.f32 0.0, %v1185
        %v1187 = vpop.f32.mrb[0].mxu0
        %1188 = vdwg.mxu0
        %v1189 = vadd.f32 %v1109, %v1186
        %s1190 = scalar_lea.vmem %s0, 28
        %v1191 = vld [vmem:[%s1190] sm:$0xf]
        %v1192 = vld [vmem:[%s623] sm:$0xf]
        %v1194 = vsel %vm636, %v1191, 0
        %v1197 = vsel %vm640, %v1192, 0
        %1199 = vmatprep.subr.mxu0 0.0
        %1200 = vmatpush1.msra.mxu0 %v1197
        %1201 = vmatprep.subr.mxu0 0.0
        %1202 = vmatpush1.msra.mxu0 0.0
        %1203 = vmatprep.subr.mxu0 0.0
        %1204 = vmatpush1.msra.mxu0 0.0
        %1205 = vmatprep.subr.mxu0 0.0
        %1206 = vmatpush1.msra.mxu0 0.0
        %1207 = vmatprep.subr.mxu0 0.0
        %1208 = vmatpush1.msra.mxu0 0.0
        %1209 = vmatprep.subr.mxu0 0.0
        %1210 = vmatpush1.msra.mxu0 0.0
        %1211 = vmatprep.subr.mxu0 0.0
        %1212 = vmatpush1.msra.mxu0 0.0
        %1213 = vmatprep.subr.mxu0 0.0
        %1214 = vmatpush1.msra.mxu0 0.0
        %1215 = vmatprep.subr.mxu0 0.0
        %1216 = vmatpush1.msra.mxu0 0.0
        %1217 = vmatprep.subr.mxu0 0.0
        %1218 = vmatpush1.msra.mxu0 0.0
        %1219 = vmatprep.subr.mxu0 0.0
        %1220 = vmatpush1.msra.mxu0 0.0
        %1221 = vmatprep.subr.mxu0 0.0
        %1222 = vmatpush1.msra.mxu0 0.0
        %1223 = vmatprep.subr.mxu0 0.0
        %1224 = vmatpush1.msra.mxu0 0.0
        %1225 = vmatprep.subr.mxu0 0.0
        %1226 = vmatpush1.msra.mxu0 0.0
        %1227 = vmatprep.subr.mxu0 0.0
        %1228 = vmatpush1.msra.mxu0 0.0
        %1229 = vmatprep.subr.mxu0 0.0
        %1230 = vmatpush1.msra.mxu0 0.0
        %1231 = vmatprep.subr.mxu0 0.0
        %1232 = vmatpush1.msra.mxu0 0.0
        %1233 = vmatprep.subr.mxu0 0.0
        %1234 = vmatpush1.msra.mxu0 0.0
        %1235 = vmatprep.subr.mxu0 0.0
        %1236 = vmatpush1.msra.mxu0 0.0
        %1237 = vmatprep.subr.mxu0 0.0
        %1238 = vmatpush1.msra.mxu0 0.0
        %1239 = vmatprep.subr.mxu0 0.0
        %1240 = vmatpush1.msra.mxu0 0.0
        %1241 = vmatprep.subr.mxu0 0.0
        %1242 = vmatpush1.msra.mxu0 0.0
        %1243 = vmatprep.subr.mxu0 0.0
        %1244 = vmatpush1.msra.mxu0 0.0
        %1245 = vmatprep.subr.mxu0 0.0
        %1246 = vmatpush1.msra.mxu0 0.0
        %1247 = vmatprep.subr.mxu0 0.0
        %1248 = vmatpush1.msra.mxu0 0.0
        %1249 = vmatprep.subr.mxu0 0.0
        %1250 = vmatpush1.msra.mxu0 0.0
        %1251 = vmatprep.subr.mxu0 0.0
        %1252 = vmatpush1.msra.mxu0 0.0
        %1253 = vmatprep.subr.mxu0 0.0
        %1254 = vmatpush1.msra.mxu0 0.0
        %1255 = vmatprep.subr.mxu0 0.0
        %1256 = vmatpush1.msra.mxu0 0.0
        %1257 = vmatprep.subr.mxu0 0.0
        %1258 = vmatpush1.msra.mxu0 0.0
        %1259 = vmatprep.subr.mxu0 0.0
        %1260 = vmatpush1.msra.mxu0 0.0
        %1261 = vmatprep.subr.mxu0 0.0
        %1262 = vmatpush1.msra.mxu0 0.0
        %1263 = vmatprep.mubr.f32.mxu0 0.0
        %1264 = vmatmul.mubr.f32.gmra.mrb[0].mxu0 %v1194
        %v1265 = vpop.f32.mrb[0].mxu0
        %v1266 = vadd.f32 0.0, %v1265
        %v1267 = vpop.f32.mrb[0].mxu0
        %1268 = vdwg.mxu0
        %v1269 = vadd.f32 %v1189, %v1266
        %s1270 = scalar_lea.vmem %s0, 32
        %v1271 = vld [vmem:[%s1270] sm:$0xf]
        %v1272 = vld [vmem:[%s630] sm:$0xf]
        %v1274 = vsel %vm636, %v1271, 0
        %v1277 = vsel %vm640, %v1272, 0
        %1279 = vmatprep.subr.mxu0 0.0
        %1280 = vmatpush1.msra.mxu0 %v1277
        %1281 = vmatprep.subr.mxu0 0.0
        %1282 = vmatpush1.msra.mxu0 0.0
        %1283 = vmatprep.subr.mxu0 0.0
        %1284 = vmatpush1.msra.mxu0 0.0
        %1285 = vmatprep.subr.mxu0 0.0
        %1286 = vmatpush1.msra.mxu0 0.0
        %1287 = vmatprep.subr.mxu0 0.0
        %1288 = vmatpush1.msra.mxu0 0.0
        %1289 = vmatprep.subr.mxu0 0.0
        %1290 = vmatpush1.msra.mxu0 0.0
        %1291 = vmatprep.subr.mxu0 0.0
        %1292 = vmatpush1.msra.mxu0 0.0
        %1293 = vmatprep.subr.mxu0 0.0
        %1294 = vmatpush1.msra.mxu0 0.0
        %1295 = vmatprep.subr.mxu0 0.0
        %1296 = vmatpush1.msra.mxu0 0.0
        %1297 = vmatprep.subr.mxu0 0.0
        %1298 = vmatpush1.msra.mxu0 0.0
        %1299 = vmatprep.subr.mxu0 0.0
        %1300 = vmatpush1.msra.mxu0 0.0
        %1301 = vmatprep.subr.mxu0 0.0
        %1302 = vmatpush1.msra.mxu0 0.0
        %1303 = vmatprep.subr.mxu0 0.0
        %1304 = vmatpush1.msra.mxu0 0.0
        %1305 = vmatprep.subr.mxu0 0.0
        %1306 = vmatpush1.msra.mxu0 0.0
        %1307 = vmatprep.subr.mxu0 0.0
        %1308 = vmatpush1.msra.mxu0 0.0
        %1309 = vmatprep.subr.mxu0 0.0
        %1310 = vmatpush1.msra.mxu0 0.0
        %1311 = vmatprep.subr.mxu0 0.0
        %1312 = vmatpush1.msra.mxu0 0.0
        %1313 = vmatprep.subr.mxu0 0.0
        %1314 = vmatpush1.msra.mxu0 0.0
        %1315 = vmatprep.subr.mxu0 0.0
        %1316 = vmatpush1.msra.mxu0 0.0
        %1317 = vmatprep.subr.mxu0 0.0
        %1318 = vmatpush1.msra.mxu0 0.0
        %1319 = vmatprep.subr.mxu0 0.0
        %1320 = vmatpush1.msra.mxu0 0.0
        %1321 = vmatprep.subr.mxu0 0.0
        %1322 = vmatpush1.msra.mxu0 0.0
        %1323 = vmatprep.subr.mxu0 0.0
        %1324 = vmatpush1.msra.mxu0 0.0
        %1325 = vmatprep.subr.mxu0 0.0
        %1326 = vmatpush1.msra.mxu0 0.0
        %1327 = vmatprep.subr.mxu0 0.0
        %1328 = vmatpush1.msra.mxu0 0.0
        %1329 = vmatprep.subr.mxu0 0.0
        %1330 = vmatpush1.msra.mxu0 0.0
        %1331 = vmatprep.subr.mxu0 0.0
        %1332 = vmatpush1.msra.mxu0 0.0
        %1333 = vmatprep.subr.mxu0 0.0
        %1334 = vmatpush1.msra.mxu0 0.0
        %1335 = vmatprep.subr.mxu0 0.0
        %1336 = vmatpush1.msra.mxu0 0.0
        %1337 = vmatprep.subr.mxu0 0.0
        %1338 = vmatpush1.msra.mxu0 0.0
        %1339 = vmatprep.subr.mxu0 0.0
        %1340 = vmatpush1.msra.mxu0 0.0
        %1341 = vmatprep.subr.mxu0 0.0
        %1342 = vmatpush1.msra.mxu0 0.0
        %1343 = vmatprep.mubr.f32.mxu0 0.0
        %1344 = vmatmul.mubr.f32.gmra.mrb[0].mxu0 %v1274
        %v1345 = vpop.f32.mrb[0].mxu0
        %v1346 = vadd.f32 0.0, %v1345
        %v1347 = vpop.f32.mrb[0].mxu0
        %1348 = vdwg.mxu0
        %v1349 = vadd.f32 %v1269, %v1346
        %v1350 = vld [vmem:[%s1] sm:$0xf]
        %1352 = vset.pattern.permute.xlu0 0
        %1353 = vperm.xlu0 %1352, %v1350
        %v1354 = vpop.permute.xlu0 %1353
        %v1356 = vadd.f32 %v1349, %v1354
        %vm1357 = vcmask 519168
        %1358 = vst.msk [vmem:[%s567] sm:$0xf] %vm1357, %v1356
        %s1359 = sand.u32 %s341, 1
        %s1360 = scalar_lea.sflag [#allocation3], %s1359
        %s1361 = sand.u32 %s341, 1
        %s1362 = smul.addr %s1361, 4
        %s1363 = scalar_lea.vmem [#allocation2], %s1362
        // Predicated region
        $region65: #{tpu_custom_call.1} parent=63 // pred_check
          %p1364 = pneg %p351
        $region66: #{tpu_custom_call.1} parent=63 // pred_check_branch
          %1366 = sbr.rel (%p1364) target = $region68
        $region67: #{tpu_custom_call.1} parent=63 // pred_region
          %s1368 = ssub.s32 64, 64
          %1369 = vsyncadd %s1360, %s1368
          %s1370 = sadd.s32 %s30, %s29
          %s1371 = smul.addr %s1370, 64
          %s1372 = scalar_lea.hbm %s11, %s1371
          %s1374 = sshll.u32 %s1363, 4
          %s1375 = int_to_ptr.vmem [resolvable:$true] %s1374
          %1377 = dma.vmem_to_hbm [thread:$0]  %s1375, 64, %s1372, %s1360
        $region68: #{tpu_custom_call.1} parent=63 // pred_fallthru
          _
      $region64: #{tpu_custom_call.1} parent=5 // pred_fallthru
        _
      %p1378 = scmp.le.s32.totalorder 2, %s20
      // Predicated region
      $region69: #{tpu_custom_call.1} parent=5 // pred_check
        %p1379 = pneg %p1378
      $region70: #{tpu_custom_call.1} parent=5 // pred_check_branch
        %1381 = sbr.rel (%p1379) target = $region72
      $region71: #{tpu_custom_call.1} parent=5 // pred_region
        %s1382 = ssub.s32 %s20, 2
        // Predicated region
        $region73: #{tpu_custom_call.1} parent=71 // pred_check
          %p1383 = pneg %p357
        $region74: #{tpu_custom_call.1} parent=71 // pred_check_branch
          %1385 = sbr.rel (%p1383) target = $region76
        $region75: #{tpu_custom_call.1} parent=71 // pred_region
          %s1386 = sand.u32 %s342, 1
          %s1387 = scalar_lea.sflag [#allocation3], %s1386
          %s1388 = sand.u32 %s342, 1
          %s1389 = smul.addr %s1388, 4
          %s1390 = scalar_lea.vmem [#allocation2], %s1389
          %1391 = dma.done %s1387, 64
        $region76: #{tpu_custom_call.1} parent=71 // pred_fallthru
          _
      $region72: #{tpu_custom_call.1} parent=5 // pred_fallthru
        _
    $region6: #{tpu_custom_call.1} parent=1 // loop_footer
      %s24 = sadd.s32 1, %s20
    $region7: #{tpu_custom_call.1} parent=1 // loop_footer_branch
      %19 = sbr.rel target = $region3
    $region8: #{tpu_custom_call.1} parent=1 // loop_exit
      _
    %1392 = vsyncpa [#allocation3], 1
    %s1393 = scalar_lea.sflag [#allocation3], 1
    %1394 = vsyncpa %s1393, 1

</llo_original>
